<compile_context>
chip_gen: v7x
topology: tpu7x:2x2x1
jax: 0.10.0
libtpu: 0.0.40
codegen_flags: <defaults>
</compile_context>

<pallas_src>
import jax
import jax.numpy as jnp
from jax import lax
from jax.experimental import pallas as pl
from jax.experimental.pallas import tpu as pltpu


def _sign(x):
    # matches torch.sign: -1 / 0 / +1
    return jnp.where(x > 0, 1.0, jnp.where(x < 0, -1.0, 0.0)).astype(x.dtype)


def _round_up(v, m):
    return ((v + m - 1) // m) * m


def _bbcu_down_kernel(xt_ref, w_ref, sc_ref, m0_ref, al_ref, b0_ref, b1_ref,
                      o_ref, xpad_ref):
    # Block shapes (bt batch elements per grid step; channels lane-padded):
    #   xt_ref  : (bt, 4, Hp, Wp, Cinp)   stacked 2x2 average-pool taps (f32)
    #   w_ref   : (9*Cinp, Coutp)         sign(W), bf16, (kh,kw,cin)-major rows
    #   sc_ref  : (1, Coutp)              per-out-channel mean|W| (f32)
    #   m0/al/b0/b1_ref : (1, Cinp|Coutp) biases / PReLU slope (f32)
    #   o_ref   : (bt, Hp, Wp, Coutp)
    #   xpad_ref: (bt, Hp+2, Wp+2, Cinp)  persistent VMEM scratch (f32)
    bt, Hp, Wp, coutp = o_ref.shape
    cinp = xt_ref.shape[-1]

    # --- AvgPool2d(kernel_size=2, stride=2): taps are pre-stacked on axis 1 ---
    xt = xt_ref[...]                                       # (bt,4,Hp,Wp,Cinp)
    pooled = (xt[:, 0] + xt[:, 1] + xt[:, 2] + xt[:, 3]) * 0.25

    # --- LearnableBias (move0) + BinaryActivation forward (== sign) ---
    xb = _sign(pooled + m0_ref[...].reshape(1, 1, 1, cinp))

    # --- zero only the 1-pixel border; interior is fully overwritten each step ---
    xpad_ref[:, 0:1, :, :] = jnp.zeros((bt, 1, Wp + 2, cinp), jnp.float32)
    xpad_ref[:, Hp + 1:Hp + 2, :, :] = jnp.zeros((bt, 1, Wp + 2, cinp), jnp.float32)
    xpad_ref[:, :, 0:1, :] = jnp.zeros((bt, Hp + 2, 1, cinp), jnp.float32)
    xpad_ref[:, :, Wp + 1:Wp + 2, :] = jnp.zeros((bt, Hp + 2, 1, cinp), jnp.float32)
    xpad_ref[:, 1:Hp + 1, 1:Wp + 1, :] = xb

    # --- im2col: build one (bt,Hp,Wp,9*Cinp) bf16 slab -> single MXU matmul ---
    # sign() values are exactly representable in bf16; f32 accumulate keeps it exact.
    patches = []
    for kh in range(3):
        for kw in range(3):
            patches.append(
                xpad_ref[:, kh:kh + Hp, kw:kw + Wp, :].astype(jnp.bfloat16))
    slab = jnp.concatenate(patches, axis=-1)               # (bt,Hp,Wp,9*Cinp)

    acc = lax.dot_general(
        slab, w_ref[...],
        dimension_numbers=(((3,), (0,)), ((), ())),
        preferred_element_type=jnp.float32)                # (bt,Hp,Wp,Coutp) f32

    # --- fused epilogue: per-channel |W|-mean scale + RPReLU (b0, PReLU, b1) ---
    scale = sc_ref[...].reshape(1, 1, 1, coutp)
    b0 = b0_ref[...].reshape(1, 1, 1, coutp)
    b1 = b1_ref[...].reshape(1, 1, 1, coutp)
    slope = al_ref[...].reshape(1, 1, 1, coutp)
    y = acc * scale + b0
    y = jnp.where(y > 0, y, slope * y)
    o_ref[...] = (y + b1).astype(o_ref.dtype)


def binary_conv2d_bbcu_down(x, w, m0, alpha, b0, b1,
                            *, vmem_budget_bytes=12 * 1024 * 1024):
    """x: (B, Cin, H, W) NCHW float32 -> (B, Cout, H//2, W//2) NCHW float32."""
    B, C, H, W = x.shape
    Cout = w.shape[0]
    assert H % 2 == 0 and W % 2 == 0, "2x2 average pool needs even H and W"
    Hp, Wp = H // 2, W // 2
    Cinp = _round_up(C, 128)       # lane-dense channels (review item: pad to 128)
    Coutp = _round_up(Cout, 128)

    # --- wrapper glue: single transpose producing the stacked pool-tap tensor ---
    x_nhwc = jnp.transpose(x, (0, 2, 3, 1))                            # (B,H,W,C)
    xt = x_nhwc.reshape(B, Hp, 2, Wp, 2, C)
    xt = jnp.transpose(xt, (0, 2, 4, 1, 3, 5)).reshape(B, 4, Hp, Wp, C)
    xt = jnp.pad(xt, ((0, 0),) * 4 + ((0, Cinp - C),))                 # (B,4,Hp,Wp,Cinp)

    # --- weight binarization hoisted out of the kernel ---
    scale = jnp.mean(jnp.abs(w), axis=(1, 2, 3))                       # (Cout,) f32
    w_sign = jnp.transpose(_sign(w), (2, 3, 1, 0))                     # (3,3,Cin,Cout)
    w_sign = jnp.pad(w_sign, ((0, 0), (0, 0), (0, Cinp - C), (0, Coutp - Cout)))
    w2d = w_sign.reshape(9 * Cinp, Coutp).astype(jnp.bfloat16)         # (9*Cinp,Coutp)

    def pad1(v, n):
        v = v.reshape(-1).astype(jnp.float32)
        return jnp.pad(v, (0, n - v.shape[0])).reshape(1, n)

    sc_p = pad1(scale, Coutp)
    m0_p = pad1(m0, Cinp)
    al_p = pad1(alpha, Coutp)
    b0_p = pad1(b0, Coutp)
    b1_p = pad1(b1, Coutp)

    # --- choose batch block (bt) so residency stays inside the VMEM budget ---
    def footprint(bt):
        f32, bf16 = 4, 2
        return (2 * (bt * 4 * Hp * Wp * Cinp * f32            # double-buffered input
                     + bt * Hp * Wp * Coutp * f32)            # double-buffered output
                + bt * (Hp + 2) * (Wp + 2) * Cinp * f32        # padded scratch
                + bt * Hp * Wp * 9 * Cinp * bf16               # live im2col slab
                + 2 * 9 * Cinp * Coutp * bf16)                 # weights

    bt = 1
    for cand in range(B, 0, -1):
        if B % cand == 0 and footprint(cand) <= vmem_budget_bytes:
            bt = cand
            break

    grid_spec = pltpu.PrefetchScalarGridSpec(
        num_scalar_prefetch=0,
        grid=(B // bt,),
        in_specs=[
            pl.BlockSpec((bt, 4, Hp, Wp, Cinp), lambda b: (b, 0, 0, 0, 0)),
            pl.BlockSpec((9 * Cinp, Coutp), lambda b: (0, 0)),
            pl.BlockSpec((1, Coutp), lambda b: (0, 0)),
            pl.BlockSpec((1, Cinp), lambda b: (0, 0)),
            pl.BlockSpec((1, Coutp), lambda b: (0, 0)),
            pl.BlockSpec((1, Coutp), lambda b: (0, 0)),
            pl.BlockSpec((1, Coutp), lambda b: (0, 0)),
        ],
        out_specs=pl.BlockSpec((bt, Hp, Wp, Coutp), lambda b: (b, 0, 0, 0)),
        scratch_shapes=[pltpu.VMEM((bt, Hp + 2, Wp + 2, Cinp), jnp.float32)],
    )

    out_nhwc = pl.pallas_call(
        _bbcu_down_kernel,
        out_shape=jax.ShapeDtypeStruct((B, Hp, Wp, Coutp), jnp.float32),
        grid_spec=grid_spec,
        compiler_params=pltpu.CompilerParams(
            dimension_semantics=("parallel",),       # batch carries no accumulator
            vmem_limit_bytes=32 * 1024 * 1024),
    )(xt, w2d, sc_p, m0_p, al_p, b0_p, b1_p)

    out_nhwc = out_nhwc[..., :Cout]                  # drop lane padding
    return jnp.transpose(out_nhwc, (0, 3, 1, 2))     # back to NCHW


def _reference(x, w, m0, alpha, b0, b1):
    """Pure-JAX reference matching the PyTorch forward (NCHW)."""
    B, C, H, W = x.shape
    pooled = x.reshape(B, C, H // 2, 2, W // 2, 2).mean(axis=(3, 5))
    z = _sign(pooled + m0.reshape(1, C, 1, 1))
    scale = jnp.mean(jnp.abs(w), axis=(1, 2, 3), keepdims=True)   # (Cout,1,1,1)
    bw = scale * _sign(w)
    y = lax.conv_general_dilated(
        z, bw, window_strides=(1, 1), padding=((1, 1), (1, 1)),
        dimension_numbers=('NCHW', 'OIHW', 'NCHW'),
        precision=lax.Precision.HIGHEST)
    y = y + b0.reshape(1, -1, 1, 1)
    y = jnp.where(y > 0, y, alpha.reshape(1, -1, 1, 1) * y)
    return y + b1.reshape(1, -1, 1, 1)


if __name__ == "__main__":
    key = jax.random.PRNGKey(0)
    B, Cin, H, W = 2, 4, 16, 16
    Cout = 2 * Cin                      # "downsample and double channels"
    kx, kw, km, ka, kb0, kb1 = jax.random.split(key, 6)

    x = jax.random.normal(kx, (B, Cin, H, W), jnp.float32)

    # Parameters (deterministic, synthetic — shapes match the module __init__).
    fan_in = Cin * 3 * 3
    bound = 1.0 / (fan_in ** 0.5)
    w = jax.random.uniform(kw, (Cout, Cin, 3, 3), jnp.float32, -bound, bound)
    m0 = 0.05 * jax.random.normal(km, (Cin,), jnp.float32)
    alpha = 0.25 + 0.05 * jax.random.normal(ka, (Cout,), jnp.float32)
    b0 = 0.05 * jax.random.normal(kb0, (Cout,), jnp.float32)
    b1 = 0.05 * jax.random.normal(kb1, (Cout,), jnp.float32)

    out = jax.block_until_ready(binary_conv2d_bbcu_down(x, w, m0, alpha, b0, b1))
    ref = _reference(x, w, m0, alpha, b0, b1)

    assert out.shape == (B, Cout, H // 2, W // 2), out.shape
    assert jnp.allclose(out, ref, atol=1e-3, rtol=1e-3), float(jnp.max(jnp.abs(out - ref)))
    print("KERNEL_OK")
</pallas_src>

<mosaic_0001>
module attributes {stable_mosaic.version = 11 : i64} {
  func.func @_bbcu_down_kernel(%arg0: i32, %arg1: memref<2x4x8x8x128xf32, #tpu.memory_space<vmem>>, %arg2: memref<1152x128xbf16, #tpu.memory_space<vmem>>, %arg3: memref<1x128xf32, #tpu.memory_space<vmem>>, %arg4: memref<1x128xf32, #tpu.memory_space<vmem>>, %arg5: memref<1x128xf32, #tpu.memory_space<vmem>>, %arg6: memref<1x128xf32, #tpu.memory_space<vmem>>, %arg7: memref<1x128xf32, #tpu.memory_space<vmem>>, %arg8: memref<2x8x8x128xf32, #tpu.memory_space<vmem>>, %arg9: memref<2x10x10x128xf32, #tpu.memory_space<vmem>>) attributes {dimension_semantics = [#tpu.dimension_semantics<parallel>], iteration_bounds = array<i64: 1>, scalar_prefetch = 0 : i64, scratch_operands = 1 : i64, tpu.core_type = #tpu.core_type<tc>, window_params = [{transform_indices = @transform_0, window_bounds = array<i64: 2, 4, 8, 8, 128>}, {pipeline_mode = #tpu.pipeline_mode<synchronous>, transform_indices = @transform_1, window_bounds = array<i64: 1152, 128>}, {pipeline_mode = #tpu.pipeline_mode<synchronous>, transform_indices = @transform_2, window_bounds = array<i64: 1, 128>}, {pipeline_mode = #tpu.pipeline_mode<synchronous>, transform_indices = @transform_3, window_bounds = array<i64: 1, 128>}, {pipeline_mode = #tpu.pipeline_mode<synchronous>, transform_indices = @transform_4, window_bounds = array<i64: 1, 128>}, {pipeline_mode = #tpu.pipeline_mode<synchronous>, transform_indices = @transform_5, window_bounds = array<i64: 1, 128>}, {pipeline_mode = #tpu.pipeline_mode<synchronous>, transform_indices = @transform_6, window_bounds = array<i64: 1, 128>}, {transform_indices = @transform_7, window_bounds = array<i64: 2, 8, 8, 128>}]} {
    %c0 = arith.constant 0 : index
    %c0_0 = arith.constant 0 : index
    %c0_1 = arith.constant 0 : index
    %c0_2 = arith.constant 0 : index
    %c0_3 = arith.constant 0 : index
    %0 = vector.load %arg1[%c0, %c0_0, %c0_1, %c0_2, %c0_3] : memref<2x4x8x8x128xf32, #tpu.memory_space<vmem>>, vector<2x4x8x8x128xf32>
    %1 = vector.extract_strided_slice %0 {offsets = [0, 0, 0, 0, 0], sizes = [2, 1, 8, 8, 128], strides = [1, 1, 1, 1, 1]} : vector<2x4x8x8x128xf32> to vector<2x1x8x8x128xf32>
    %2 = vector.shape_cast %1 : vector<2x1x8x8x128xf32> to vector<2x8x8x128xf32>
    %3 = vector.extract_strided_slice %0 {offsets = [0, 1, 0, 0, 0], sizes = [2, 1, 8, 8, 128], strides = [1, 1, 1, 1, 1]} : vector<2x4x8x8x128xf32> to vector<2x1x8x8x128xf32>
    %4 = vector.shape_cast %3 : vector<2x1x8x8x128xf32> to vector<2x8x8x128xf32>
    %5 = arith.addf %2, %4 : vector<2x8x8x128xf32>
    %6 = vector.extract_strided_slice %0 {offsets = [0, 2, 0, 0, 0], sizes = [2, 1, 8, 8, 128], strides = [1, 1, 1, 1, 1]} : vector<2x4x8x8x128xf32> to vector<2x1x8x8x128xf32>
    %7 = vector.shape_cast %6 : vector<2x1x8x8x128xf32> to vector<2x8x8x128xf32>
    %8 = arith.addf %5, %7 : vector<2x8x8x128xf32>
    %9 = vector.extract_strided_slice %0 {offsets = [0, 3, 0, 0, 0], sizes = [2, 1, 8, 8, 128], strides = [1, 1, 1, 1, 1]} : vector<2x4x8x8x128xf32> to vector<2x1x8x8x128xf32>
    %10 = vector.shape_cast %9 : vector<2x1x8x8x128xf32> to vector<2x8x8x128xf32>
    %11 = arith.addf %8, %10 : vector<2x8x8x128xf32>
    %cst = arith.constant 2.500000e-01 : f32
    %12 = vector.broadcast %cst : f32 to vector<2x8x8x128xf32>
    %13 = arith.mulf %11, %12 : vector<2x8x8x128xf32>
    %c0_4 = arith.constant 0 : index
    %c0_5 = arith.constant 0 : index
    %14 = vector.load %arg4[%c0_4, %c0_5] : memref<1x128xf32, #tpu.memory_space<vmem>>, vector<1x128xf32>
    %15 = vector.shape_cast %14 : vector<1x128xf32> to vector<1x1x1x128xf32>
    %16 = vector.broadcast %15 : vector<1x1x1x128xf32> to vector<2x8x8x128xf32>
    %17 = arith.addf %13, %16 : vector<2x8x8x128xf32>
    %cst_6 = arith.constant 0.000000e+00 : f32
    %18 = vector.broadcast %cst_6 : f32 to vector<2x8x8x128xf32>
    %19 = arith.cmpf ogt, %17, %18 : vector<2x8x8x128xf32>
    %cst_7 = arith.constant 0.000000e+00 : f32
    %20 = vector.broadcast %cst_7 : f32 to vector<2x8x8x128xf32>
    %21 = arith.cmpf olt, %17, %20 : vector<2x8x8x128xf32>
    %cst_8 = arith.constant -1.000000e+00 : f32
    %cst_9 = arith.constant 0.000000e+00 : f32
    %22 = vector.broadcast %cst_8 : f32 to vector<2x8x8x128xf32>
    %23 = vector.broadcast %cst_9 : f32 to vector<2x8x8x128xf32>
    %24 = arith.select %21, %22, %23 : vector<2x8x8x128xi1>, vector<2x8x8x128xf32>
    %cst_10 = arith.constant 1.000000e+00 : f32
    %25 = vector.broadcast %cst_10 : f32 to vector<2x8x8x128xf32>
    %26 = arith.select %19, %25, %24 : vector<2x8x8x128xi1>, vector<2x8x8x128xf32>
    %cst_11 = arith.constant 0.000000e+00 : f32
    %27 = vector.broadcast %cst_11 : f32 to vector<2x1x10x128xf32>
    %c0_12 = arith.constant 0 : index
    %c0_13 = arith.constant 0 : index
    %c0_14 = arith.constant 0 : index
    %c0_15 = arith.constant 0 : index
    %28 = vector.load %arg9[%c0_12, %c0_13, %c0_14, %c0_15] : memref<2x10x10x128xf32, #tpu.memory_space<vmem>>, vector<2x1x10x128xf32>
    tpu.vector_store %arg9[%c0_12, %c0_13, %c0_14, %c0_15], %27 {strides = array<i32>} : memref<2x10x10x128xf32, #tpu.memory_space<vmem>>, vector<2x1x10x128xf32>,
    %cst_16 = arith.constant 0.000000e+00 : f32
    %29 = vector.broadcast %cst_16 : f32 to vector<2x1x10x128xf32>
    %c0_17 = arith.constant 0 : index
    %c9 = arith.constant 9 : index
    %c0_18 = arith.constant 0 : index
    %c0_19 = arith.constant 0 : index
    %30 = vector.load %arg9[%c0_17, %c9, %c0_18, %c0_19] : memref<2x10x10x128xf32, #tpu.memory_space<vmem>>, vector<2x1x10x128xf32>
    tpu.vector_store %arg9[%c0_17, %c9, %c0_18, %c0_19], %29 {strides = array<i32>} : memref<2x10x10x128xf32, #tpu.memory_space<vmem>>, vector<2x1x10x128xf32>,
    %cst_20 = arith.constant 0.000000e+00 : f32
    %31 = vector.broadcast %cst_20 : f32 to vector<2x10x1x128xf32>
    %c0_21 = arith.constant 0 : index
    %c0_22 = arith.constant 0 : index
    %c0_23 = arith.constant 0 : index
    %c0_24 = arith.constant 0 : index
    %32 = vector.load %arg9[%c0_21, %c0_22, %c0_23, %c0_24] : memref<2x10x10x128xf32, #tpu.memory_space<vmem>>, vector<2x10x1x128xf32>
    tpu.vector_store %arg9[%c0_21, %c0_22, %c0_23, %c0_24], %31 {strides = array<i32>} : memref<2x10x10x128xf32, #tpu.memory_space<vmem>>, vector<2x10x1x128xf32>,
    %cst_25 = arith.constant 0.000000e+00 : f32
    %33 = vector.broadcast %cst_25 : f32 to vector<2x10x1x128xf32>
    %c0_26 = arith.constant 0 : index
    %c0_27 = arith.constant 0 : index
    %c9_28 = arith.constant 9 : index
    %c0_29 = arith.constant 0 : index
    %34 = vector.load %arg9[%c0_26, %c0_27, %c9_28, %c0_29] : memref<2x10x10x128xf32, #tpu.memory_space<vmem>>, vector<2x10x1x128xf32>
    tpu.vector_store %arg9[%c0_26, %c0_27, %c9_28, %c0_29], %33 {strides = array<i32>} : memref<2x10x10x128xf32, #tpu.memory_space<vmem>>, vector<2x10x1x128xf32>,
    %c0_30 = arith.constant 0 : index
    %c1 = arith.constant 1 : index
    %c1_31 = arith.constant 1 : index
    %c0_32 = arith.constant 0 : index
    %35 = vector.load %arg9[%c0_30, %c1, %c1_31, %c0_32] : memref<2x10x10x128xf32, #tpu.memory_space<vmem>>, vector<2x8x8x128xf32>
    tpu.vector_store %arg9[%c0_30, %c1, %c1_31, %c0_32], %26 {strides = array<i32>} : memref<2x10x10x128xf32, #tpu.memory_space<vmem>>, vector<2x8x8x128xf32>,
    %c0_33 = arith.constant 0 : index
    %c0_34 = arith.constant 0 : index
    %c0_35 = arith.constant 0 : index
    %c0_36 = arith.constant 0 : index
    %36 = vector.load %arg9[%c0_33, %c0_34, %c0_35, %c0_36] : memref<2x10x10x128xf32, #tpu.memory_space<vmem>>, vector<2x8x8x128xf32>
    %37 = arith.truncf %36 : vector<2x8x8x128xf32> to vector<2x8x8x128xbf16>
    %c0_37 = arith.constant 0 : index
    %c0_38 = arith.constant 0 : index
    %c1_39 = arith.constant 1 : index
    %c0_40 = arith.constant 0 : index
    %38 = vector.load %arg9[%c0_37, %c0_38, %c1_39, %c0_40] : memref<2x10x10x128xf32, #tpu.memory_space<vmem>>, vector<2x8x8x128xf32>
    %39 = arith.truncf %38 : vector<2x8x8x128xf32> to vector<2x8x8x128xbf16>
    %c0_41 = arith.constant 0 : index
    %c0_42 = arith.constant 0 : index
    %c2 = arith.constant 2 : index
    %c0_43 = arith.constant 0 : index
    %40 = vector.load %arg9[%c0_41, %c0_42, %c2, %c0_43] : memref<2x10x10x128xf32, #tpu.memory_space<vmem>>, vector<2x8x8x128xf32>
    %41 = arith.truncf %40 : vector<2x8x8x128xf32> to vector<2x8x8x128xbf16>
    %c0_44 = arith.constant 0 : index
    %c1_45 = arith.constant 1 : index
    %c0_46 = arith.constant 0 : index
    %c0_47 = arith.constant 0 : index
    %42 = vector.load %arg9[%c0_44, %c1_45, %c0_46, %c0_47] : memref<2x10x10x128xf32, #tpu.memory_space<vmem>>, vector<2x8x8x128xf32>
    %43 = arith.truncf %42 : vector<2x8x8x128xf32> to vector<2x8x8x128xbf16>
    %c0_48 = arith.constant 0 : index
    %c1_49 = arith.constant 1 : index
    %c1_50 = arith.constant 1 : index
    %c0_51 = arith.constant 0 : index
    %44 = vector.load %arg9[%c0_48, %c1_49, %c1_50, %c0_51] : memref<2x10x10x128xf32, #tpu.memory_space<vmem>>, vector<2x8x8x128xf32>
    %45 = arith.truncf %44 : vector<2x8x8x128xf32> to vector<2x8x8x128xbf16>
    %c0_52 = arith.constant 0 : index
    %c1_53 = arith.constant 1 : index
    %c2_54 = arith.constant 2 : index
    %c0_55 = arith.constant 0 : index
    %46 = vector.load %arg9[%c0_52, %c1_53, %c2_54, %c0_55] : memref<2x10x10x128xf32, #tpu.memory_space<vmem>>, vector<2x8x8x128xf32>
    %47 = arith.truncf %46 : vector<2x8x8x128xf32> to vector<2x8x8x128xbf16>
    %c0_56 = arith.constant 0 : index
    %c2_57 = arith.constant 2 : index
    %c0_58 = arith.constant 0 : index
    %c0_59 = arith.constant 0 : index
    %48 = vector.load %arg9[%c0_56, %c2_57, %c0_58, %c0_59] : memref<2x10x10x128xf32, #tpu.memory_space<vmem>>, vector<2x8x8x128xf32>
    %49 = arith.truncf %48 : vector<2x8x8x128xf32> to vector<2x8x8x128xbf16>
    %c0_60 = arith.constant 0 : index
    %c2_61 = arith.constant 2 : index
    %c1_62 = arith.constant 1 : index
    %c0_63 = arith.constant 0 : index
    %50 = vector.load %arg9[%c0_60, %c2_61, %c1_62, %c0_63] : memref<2x10x10x128xf32, #tpu.memory_space<vmem>>, vector<2x8x8x128xf32>
    %51 = arith.truncf %50 : vector<2x8x8x128xf32> to vector<2x8x8x128xbf16>
    %c0_64 = arith.constant 0 : index
    %c2_65 = arith.constant 2 : index
    %c2_66 = arith.constant 2 : index
    %c0_67 = arith.constant 0 : index
    %52 = vector.load %arg9[%c0_64, %c2_65, %c2_66, %c0_67] : memref<2x10x10x128xf32, #tpu.memory_space<vmem>>, vector<2x8x8x128xf32>
    %53 = arith.truncf %52 : vector<2x8x8x128xf32> to vector<2x8x8x128xbf16>
    %54 = tpu.concatenate %37, %39, %41, %43, %45, %47, %49, %51, %53 in 3 : vector<2x8x8x128xbf16>, vector<2x8x8x128xbf16>, vector<2x8x8x128xbf16>, vector<2x8x8x128xbf16>, vector<2x8x8x128xbf16>, vector<2x8x8x128xbf16>, vector<2x8x8x128xbf16>, vector<2x8x8x128xbf16>, vector<2x8x8x128xbf16> -> vector<2x8x8x1152xbf16>
    %c0_68 = arith.constant 0 : index
    %c0_69 = arith.constant 0 : index
    %55 = vector.load %arg2[%c0_68, %c0_69] : memref<1152x128xbf16, #tpu.memory_space<vmem>>, vector<1152x128xbf16>
    %cst_70 = arith.constant dense<0.000000e+00> : vector<2x8x8x128xf32>
    %56 = tpu.matmul %54, %55, %cst_70 {dimension_numbers = #tpu.dot_dimension_numbers<[3], [0], [0, 1, 2], [1], [0, 0, 0, 1, 0, 2, 1, 1], [], []>} : vector<2x8x8x1152xbf16>, vector<1152x128xbf16>, vector<2x8x8x128xf32> -> vector<2x8x8x128xf32>
    %c0_71 = arith.constant 0 : index
    %c0_72 = arith.constant 0 : index
    %57 = vector.load %arg3[%c0_71, %c0_72] : memref<1x128xf32, #tpu.memory_space<vmem>>, vector<1x128xf32>
    %58 = vector.shape_cast %57 : vector<1x128xf32> to vector<1x1x1x128xf32>
    %c0_73 = arith.constant 0 : index
    %c0_74 = arith.constant 0 : index
    %59 = vector.load %arg6[%c0_73, %c0_74] : memref<1x128xf32, #tpu.memory_space<vmem>>, vector<1x128xf32>
    %60 = vector.shape_cast %59 : vector<1x128xf32> to vector<1x1x1x128xf32>
    %c0_75 = arith.constant 0 : index
    %c0_76 = arith.constant 0 : index
    %61 = vector.load %arg7[%c0_75, %c0_76] : memref<1x128xf32, #tpu.memory_space<vmem>>, vector<1x128xf32>
    %62 = vector.shape_cast %61 : vector<1x128xf32> to vector<1x1x1x128xf32>
    %c0_77 = arith.constant 0 : index
    %c0_78 = arith.constant 0 : index
    %63 = vector.load %arg5[%c0_77, %c0_78] : memref<1x128xf32, #tpu.memory_space<vmem>>, vector<1x128xf32>
    %64 = vector.shape_cast %63 : vector<1x128xf32> to vector<1x1x1x128xf32>
    %65 = vector.broadcast %58 : vector<1x1x1x128xf32> to vector<2x8x8x128xf32>
    %66 = arith.mulf %56, %65 : vector<2x8x8x128xf32>
    %67 = vector.broadcast %60 : vector<1x1x1x128xf32> to vector<2x8x8x128xf32>
    %68 = arith.addf %66, %67 : vector<2x8x8x128xf32>
    %cst_79 = arith.constant 0.000000e+00 : f32
    %69 = vector.broadcast %cst_79 : f32 to vector<2x8x8x128xf32>
    %70 = arith.cmpf ogt, %68, %69 : vector<2x8x8x128xf32>
    %71 = vector.broadcast %64 : vector<1x1x1x128xf32> to vector<2x8x8x128xf32>
    %72 = arith.mulf %71, %68 : vector<2x8x8x128xf32>
    %73 = arith.select %70, %68, %72 : vector<2x8x8x128xi1>, vector<2x8x8x128xf32>
    %74 = vector.broadcast %62 : vector<1x1x1x128xf32> to vector<2x8x8x128xf32>
    %75 = arith.addf %73, %74 : vector<2x8x8x128xf32>
    %c0_80 = arith.constant 0 : index
    %c0_81 = arith.constant 0 : index
    %c0_82 = arith.constant 0 : index
    %c0_83 = arith.constant 0 : index
    %76 = vector.load %arg8[%c0_80, %c0_81, %c0_82, %c0_83] : memref<2x8x8x128xf32, #tpu.memory_space<vmem>>, vector<2x8x8x128xf32>
    tpu.vector_store %arg8[%c0_80, %c0_81, %c0_82, %c0_83], %75 {strides = array<i32>} : memref<2x8x8x128xf32, #tpu.memory_space<vmem>>, vector<2x8x8x128xf32>,
    return
  }
  func.func @transform_0(%arg0: i32) -> (i32, i32, i32, i32, i32) {
    %c0_i32 = arith.constant 0 : i32
    %c0_i32_0 = arith.constant 0 : i32
    %c0_i32_1 = arith.constant 0 : i32
    %c0_i32_2 = arith.constant 0 : i32
    %c0_i32_3 = arith.constant 0 : i32
    return %arg0, %c0_i32, %c0_i32_0, %c0_i32_1, %c0_i32_2 : i32, i32, i32, i32, i32
  }
  func.func @transform_1(%arg0: i32) -> (i32, i32) {
    %c0_i32 = arith.constant 0 : i32
    %c0_i32_0 = arith.constant 0 : i32
    %c0_i32_1 = arith.constant 0 : i32
    return %c0_i32, %c0_i32_0 : i32, i32
  }
  func.func @transform_2(%arg0: i32) -> (i32, i32) {
    %c0_i32 = arith.constant 0 : i32
    %c0_i32_0 = arith.constant 0 : i32
    %c0_i32_1 = arith.constant 0 : i32
    return %c0_i32, %c0_i32_0 : i32, i32
  }
  func.func @transform_3(%arg0: i32) -> (i32, i32) {
    %c0_i32 = arith.constant 0 : i32
    %c0_i32_0 = arith.constant 0 : i32
    %c0_i32_1 = arith.constant 0 : i32
    return %c0_i32, %c0_i32_0 : i32, i32
  }
  func.func @transform_4(%arg0: i32) -> (i32, i32) {
    %c0_i32 = arith.constant 0 : i32
    %c0_i32_0 = arith.constant 0 : i32
    %c0_i32_1 = arith.constant 0 : i32
    return %c0_i32, %c0_i32_0 : i32, i32
  }
  func.func @transform_5(%arg0: i32) -> (i32, i32) {
    %c0_i32 = arith.constant 0 : i32
    %c0_i32_0 = arith.constant 0 : i32
    %c0_i32_1 = arith.constant 0 : i32
    return %c0_i32, %c0_i32_0 : i32, i32
  }
  func.func @transform_6(%arg0: i32) -> (i32, i32) {
    %c0_i32 = arith.constant 0 : i32
    %c0_i32_0 = arith.constant 0 : i32
    %c0_i32_1 = arith.constant 0 : i32
    return %c0_i32, %c0_i32_0 : i32, i32
  }
  func.func @transform_7(%arg0: i32) -> (i32, i32, i32, i32) {
    %c0_i32 = arith.constant 0 : i32
    %c0_i32_0 = arith.constant 0 : i32
    %c0_i32_1 = arith.constant 0 : i32
    %c0_i32_2 = arith.constant 0 : i32
    return %arg0, %c0_i32, %c0_i32_0, %c0_i32_1 : i32, i32, i32, i32
  }
}

</mosaic_0001>

<llo_original>
// kernel: tpu_custom_call.1
$region0: #{tpu_custom_call.1}
  #allocation0 [shape = 'u32[]', space=smem, size = 0x4, offset = 0x4, fixed_abs, tag = 'smem constant byte address 0x4 - core index']
  #allocation1 [shape = 'u32[144,128]{1,0:T(1,128)}', space=vmem, size = 0x12000, scoped, tag = 'internal scratch']
  #allocation2 [shape = 'f32[2,10,10,128]{3,2,1,0:T(8,128)}', space=vmem, size = 0x28000, scoped, tag = 'scratch operand']
  %s0 = inlined_call_operand.hbm [shape: f32[2,4,8,8,128], index: 0, kind: input, shape index: {}]
  %s1 = inlined_call_operand.hbm [shape: bf16[1152,128], index: 1, kind: input, shape index: {}]
  %s2 = inlined_call_operand.vmem [shape: f32[1,128], index: 2, kind: input, shape index: {}]
  %s3 = inlined_call_operand.vmem [shape: f32[1,128], index: 3, kind: input, shape index: {}]
  %s4 = inlined_call_operand.vmem [shape: f32[1,128], index: 4, kind: input, shape index: {}]
  %s5 = inlined_call_operand.vmem [shape: f32[1,128], index: 5, kind: input, shape index: {}]
  %s6 = inlined_call_operand.vmem [shape: f32[1,128], index: 6, kind: input, shape index: {}]
  %s7 = inlined_call_operand.hbm [shape: f32[2,8,8,128], index: 7, kind: output, shape index: {}]
  %s8 = sld [smem:[#allocation0]]
  $region46: #{tpu_custom_call.1} parent=0
    _
  %s10 = ssub.s32 1, %s8
  %s11 = scalar_select 0, %s10, %s8
  $region1: #{tpu_custom_call.1} parent=0
    #allocation3 [shape = 'u8[262144]{0}', space=vmem, size = 0x40000, scoped, tag = 'input window, operand 0, single buffered']
    #allocation4 [shape = 's32[1]{0}', space=sflag, size = 0x4, scoped, tag = 'scoped memory for tpu_custom_call.1']
    #allocation5 [shape = 's32[1]{0}', space=sflag, size = 0x4, scoped, tag = 'scoped memory for tpu_custom_call.1']
    #allocation6 [shape = 'u8[294912]{0}', space=vmem, size = 0x48000, scoped, tag = 'input window, operand 1, single buffered']
    #allocation7 [shape = 's32[1]{0}', space=sflag, size = 0x4, scoped, tag = 'scoped memory for tpu_custom_call.1']
    #allocation8 [shape = 'u8[65536]{0}', space=vmem, size = 0x10000, scoped, tag = 'output window, operand 0, single buffered']
    %12 = vsyncpa [#allocation4], 0
    %13 = vsyncpa [#allocation7], 0
    %14 = vsyncpa [#allocation5], 0
    // Predicated region
    $region2: #{tpu_custom_call.1} parent=1 // pred_check
      _
    $region3: #{tpu_custom_call.1} parent=1 // pred_check_branch
      %16 = sbr.rel (0) target = $region5
    $region4: #{tpu_custom_call.1} parent=1 // pred_region
      %s18 = ssub.s32 8192, 8192
      %19 = vsyncadd [#allocation4], %s18
      %s20 = sshll.u32 [#allocation3], 4
      %s21 = int_to_ptr.vmem [resolvable:$true] %s20
      %26 = dma.hbm_to_vmem [thread:$0]  %s0, 8192, %s21, [#allocation4], 128, 128, 8
    $region5: #{tpu_custom_call.1} parent=1 // pred_fallthru
      _
    // Predicated region
    $region6: #{tpu_custom_call.1} parent=1 // pred_check
      _
    $region7: #{tpu_custom_call.1} parent=1 // pred_check_branch
      %28 = sbr.rel (0) target = $region9
    $region8: #{tpu_custom_call.1} parent=1 // pred_region
      %s30 = ssub.s32 9216, 9216
      %31 = vsyncadd [#allocation7], %s30
      %s32 = sshll.u32 [#allocation6], 4
      %s33 = int_to_ptr.vmem [resolvable:$true] %s32
      %38 = dma.hbm_to_vmem [thread:$0]  %s1, 9216, %s33, [#allocation7], 64, 64, 4
    $region9: #{tpu_custom_call.1} parent=1 // pred_fallthru
      _
    // Predicated region
    $region10: #{tpu_custom_call.1} parent=1 // pred_check
      _
    $region11: #{tpu_custom_call.1} parent=1 // pred_check_branch
      %40 = sbr.rel (0) target = $region13
    $region12: #{tpu_custom_call.1} parent=1 // pred_region
      _
    $region13: #{tpu_custom_call.1} parent=1 // pred_fallthru
      _
    // Predicated region
    $region14: #{tpu_custom_call.1} parent=1 // pred_check
      _
    $region15: #{tpu_custom_call.1} parent=1 // pred_check_branch
      %42 = sbr.rel (0) target = $region17
    $region16: #{tpu_custom_call.1} parent=1 // pred_region
      _
    $region17: #{tpu_custom_call.1} parent=1 // pred_fallthru
      _
    // Predicated region
    $region18: #{tpu_custom_call.1} parent=1 // pred_check
      _
    $region19: #{tpu_custom_call.1} parent=1 // pred_check_branch
      %44 = sbr.rel (0) target = $region21
    $region20: #{tpu_custom_call.1} parent=1 // pred_region
      _
    $region21: #{tpu_custom_call.1} parent=1 // pred_fallthru
      _
    // Predicated region
    $region22: #{tpu_custom_call.1} parent=1 // pred_check
      _
    $region23: #{tpu_custom_call.1} parent=1 // pred_check_branch
      %46 = sbr.rel (0) target = $region25
    $region24: #{tpu_custom_call.1} parent=1 // pred_region
      _
    $region25: #{tpu_custom_call.1} parent=1 // pred_fallthru
      _
    // Predicated region
    $region26: #{tpu_custom_call.1} parent=1 // pred_check
      _
    $region27: #{tpu_custom_call.1} parent=1 // pred_check_branch
      %48 = sbr.rel (0) target = $region29
    $region28: #{tpu_custom_call.1} parent=1 // pred_region
      _
    $region29: #{tpu_custom_call.1} parent=1 // pred_fallthru
      _
    // Predicated region
    $region30: #{tpu_custom_call.1} parent=1 // pred_check
      _
    $region31: #{tpu_custom_call.1} parent=1 // pred_check_branch
      %50 = sbr.rel (0) target = $region33
    $region32: #{tpu_custom_call.1} parent=1 // pred_region
      %51 = dma.done [#allocation4], 8192
    $region33: #{tpu_custom_call.1} parent=1 // pred_fallthru
      _
    // Predicated region
    $region34: #{tpu_custom_call.1} parent=1 // pred_check
      _
    $region35: #{tpu_custom_call.1} parent=1 // pred_check_branch
      %53 = sbr.rel (0) target = $region37
    $region36: #{tpu_custom_call.1} parent=1 // pred_region
      %54 = dma.done [#allocation7], 9216
    $region37: #{tpu_custom_call.1} parent=1 // pred_fallthru
      _
    %v56 = vld [vmem:[#allocation3] sm:$0xff]
    %v57 = vld [vmem:[#allocation3 + $0x8] sm:$0xff]
    %v58 = vld [vmem:[#allocation3 + $0x10] sm:$0xff]
    %v59 = vld [vmem:[#allocation3 + $0x18] sm:$0xff]
    %v60 = vld [vmem:[#allocation3 + $0x20] sm:$0xff]
    %v61 = vld [vmem:[#allocation3 + $0x28] sm:$0xff]
    %v62 = vld [vmem:[#allocation3 + $0x30] sm:$0xff]
    %v63 = vld [vmem:[#allocation3 + $0x38] sm:$0xff]
    %v64 = vld [vmem:[#allocation3 + $0x40] sm:$0xff]
    %v65 = vld [vmem:[#allocation3 + $0x48] sm:$0xff]
    %v66 = vld [vmem:[#allocation3 + $0x50] sm:$0xff]
    %v67 = vld [vmem:[#allocation3 + $0x58] sm:$0xff]
    %v68 = vld [vmem:[#allocation3 + $0x60] sm:$0xff]
    %v69 = vld [vmem:[#allocation3 + $0x68] sm:$0xff]
    %v70 = vld [vmem:[#allocation3 + $0x70] sm:$0xff]
    %v71 = vld [vmem:[#allocation3 + $0x78] sm:$0xff]
    %v72 = vld [vmem:[#allocation3 + $0x80] sm:$0xff]
    %v73 = vld [vmem:[#allocation3 + $0x88] sm:$0xff]
    %v74 = vld [vmem:[#allocation3 + $0x90] sm:$0xff]
    %v75 = vld [vmem:[#allocation3 + $0x98] sm:$0xff]
    %v76 = vld [vmem:[#allocation3 + $0xa0] sm:$0xff]
    %v77 = vld [vmem:[#allocation3 + $0xa8] sm:$0xff]
    %v78 = vld [vmem:[#allocation3 + $0xb0] sm:$0xff]
    %v79 = vld [vmem:[#allocation3 + $0xb8] sm:$0xff]
    %v80 = vld [vmem:[#allocation3 + $0xc0] sm:$0xff]
    %v81 = vld [vmem:[#allocation3 + $0xc8] sm:$0xff]
    %v82 = vld [vmem:[#allocation3 + $0xd0] sm:$0xff]
    %v83 = vld [vmem:[#allocation3 + $0xd8] sm:$0xff]
    %v84 = vld [vmem:[#allocation3 + $0xe0] sm:$0xff]
    %v85 = vld [vmem:[#allocation3 + $0xe8] sm:$0xff]
    %v86 = vld [vmem:[#allocation3 + $0xf0] sm:$0xff]
    %v87 = vld [vmem:[#allocation3 + $0xf8] sm:$0xff]
    %v88 = vld [vmem:[#allocation3 + $0x100] sm:$0xff]
    %v89 = vld [vmem:[#allocation3 + $0x108] sm:$0xff]
    %v90 = vld [vmem:[#allocation3 + $0x110] sm:$0xff]
    %v91 = vld [vmem:[#allocation3 + $0x118] sm:$0xff]
    %v92 = vld [vmem:[#allocation3 + $0x120] sm:$0xff]
    %v93 = vld [vmem:[#allocation3 + $0x128] sm:$0xff]
    %v94 = vld [vmem:[#allocation3 + $0x130] sm:$0xff]
    %v95 = vld [vmem:[#allocation3 + $0x138] sm:$0xff]
    %v96 = vld [vmem:[#allocation3 + $0x140] sm:$0xff]
    %v97 = vld [vmem:[#allocation3 + $0x148] sm:$0xff]
    %v98 = vld [vmem:[#allocation3 + $0x150] sm:$0xff]
    %v99 = vld [vmem:[#allocation3 + $0x158] sm:$0xff]
    %v100 = vld [vmem:[#allocation3 + $0x160] sm:$0xff]
    %v101 = vld [vmem:[#allocation3 + $0x168] sm:$0xff]
    %v102 = vld [vmem:[#allocation3 + $0x170] sm:$0xff]
    %v103 = vld [vmem:[#allocation3 + $0x178] sm:$0xff]
    %v104 = vld [vmem:[#allocation3 + $0x180] sm:$0xff]
    %v105 = vld [vmem:[#allocation3 + $0x188] sm:$0xff]
    %v106 = vld [vmem:[#allocation3 + $0x190] sm:$0xff]
    %v107 = vld [vmem:[#allocation3 + $0x198] sm:$0xff]
    %v108 = vld [vmem:[#allocation3 + $0x1a0] sm:$0xff]
    %v109 = vld [vmem:[#allocation3 + $0x1a8] sm:$0xff]
    %v110 = vld [vmem:[#allocation3 + $0x1b0] sm:$0xff]
    %v111 = vld [vmem:[#allocation3 + $0x1b8] sm:$0xff]
    %v112 = vld [vmem:[#allocation3 + $0x1c0] sm:$0xff]
    %v113 = vld [vmem:[#allocation3 + $0x1c8] sm:$0xff]
    %v114 = vld [vmem:[#allocation3 + $0x1d0] sm:$0xff]
    %v115 = vld [vmem:[#allocation3 + $0x1d8] sm:$0xff]
    %v116 = vld [vmem:[#allocation3 + $0x1e0] sm:$0xff]
    %v117 = vld [vmem:[#allocation3 + $0x1e8] sm:$0xff]
    %v118 = vld [vmem:[#allocation3 + $0x1f0] sm:$0xff]
    %v119 = vld [vmem:[#allocation3 + $0x1f8] sm:$0xff]
    %v120 = vadd.f32 %v56, %v64
    %v121 = vadd.f32 %v57, %v65
    %v122 = vadd.f32 %v58, %v66
    %v123 = vadd.f32 %v59, %v67
    %v124 = vadd.f32 %v60, %v68
    %v125 = vadd.f32 %v61, %v69
    %v126 = vadd.f32 %v62, %v70
    %v127 = vadd.f32 %v63, %v71
    %v128 = vadd.f32 %v88, %v96
    %v129 = vadd.f32 %v89, %v97
    %v130 = vadd.f32 %v90, %v98
    %v131 = vadd.f32 %v91, %v99
    %v132 = vadd.f32 %v92, %v100
    %v133 = vadd.f32 %v93, %v101
    %v134 = vadd.f32 %v94, %v102
    %v135 = vadd.f32 %v95, %v103
    %v136 = vadd.f32 %v120, %v72
    %v137 = vadd.f32 %v121, %v73
    %v138 = vadd.f32 %v122, %v74
    %v139 = vadd.f32 %v123, %v75
    %v140 = vadd.f32 %v124, %v76
    %v141 = vadd.f32 %v125, %v77
    %v142 = vadd.f32 %v126, %v78
    %v143 = vadd.f32 %v127, %v79
    %v144 = vadd.f32 %v128, %v104
    %v145 = vadd.f32 %v129, %v105
    %v146 = vadd.f32 %v130, %v106
    %v147 = vadd.f32 %v131, %v107
    %v148 = vadd.f32 %v132, %v108
    %v149 = vadd.f32 %v133, %v109
    %v150 = vadd.f32 %v134, %v110
    %v151 = vadd.f32 %v135, %v111
    %v152 = vadd.f32 %v136, %v80
    %v153 = vadd.f32 %v137, %v81
    %v154 = vadd.f32 %v138, %v82
    %v155 = vadd.f32 %v139, %v83
    %v156 = vadd.f32 %v140, %v84
    %v157 = vadd.f32 %v141, %v85
    %v158 = vadd.f32 %v142, %v86
    %v159 = vadd.f32 %v143, %v87
    %v160 = vadd.f32 %v144, %v112
    %v161 = vadd.f32 %v145, %v113
    %v162 = vadd.f32 %v146, %v114
    %v163 = vadd.f32 %v147, %v115
    %v164 = vadd.f32 %v148, %v116
    %v165 = vadd.f32 %v149, %v117
    %v166 = vadd.f32 %v150, %v118
    %v167 = vadd.f32 %v151, %v119
    %v168 = vmul.f32 %v152, 0.25
    %v169 = vmul.f32 %v153, 0.25
    %v170 = vmul.f32 %v154, 0.25
    %v171 = vmul.f32 %v155, 0.25
    %v172 = vmul.f32 %v156, 0.25
    %v173 = vmul.f32 %v157, 0.25
    %v174 = vmul.f32 %v158, 0.25
    %v175 = vmul.f32 %v159, 0.25
    %v176 = vmul.f32 %v160, 0.25
    %v177 = vmul.f32 %v161, 0.25
    %v178 = vmul.f32 %v162, 0.25
    %v179 = vmul.f32 %v163, 0.25
    %v180 = vmul.f32 %v164, 0.25
    %v181 = vmul.f32 %v165, 0.25
    %v182 = vmul.f32 %v166, 0.25
    %v183 = vmul.f32 %v167, 0.25
    %v184 = vld [vmem:[%s3] sm:$0x1]
    %v186 = vlaneseq
    %v187 = vshrl.u32 %v186, 7
    %v188 = vsub.s32 0, %v187
    %v189 = vrot.slane %v184, %v188
    %v191 = vadd.f32 %v168, %v189
    %v192 = vadd.f32 %v169, %v189
    %v193 = vadd.f32 %v170, %v189
    %v194 = vadd.f32 %v171, %v189
    %v195 = vadd.f32 %v172, %v189
    %v196 = vadd.f32 %v173, %v189
    %v197 = vadd.f32 %v174, %v189
    %v198 = vadd.f32 %v175, %v189
    %v199 = vadd.f32 %v176, %v189
    %v200 = vadd.f32 %v177, %v189
    %v201 = vadd.f32 %v178, %v189
    %v202 = vadd.f32 %v179, %v189
    %v203 = vadd.f32 %v180, %v189
    %v204 = vadd.f32 %v181, %v189
    %v205 = vadd.f32 %v182, %v189
    %v206 = vadd.f32 %v183, %v189
    %vm207 = vcmp.gt.f32.partialorder %v191, 0.0
    %vm208 = vcmp.gt.f32.partialorder %v192, 0.0
    %vm209 = vcmp.gt.f32.partialorder %v193, 0.0
    %vm210 = vcmp.gt.f32.partialorder %v194, 0.0
    %vm211 = vcmp.gt.f32.partialorder %v195, 0.0
    %vm212 = vcmp.gt.f32.partialorder %v196, 0.0
    %vm213 = vcmp.gt.f32.partialorder %v197, 0.0
    %vm214 = vcmp.gt.f32.partialorder %v198, 0.0
    %vm215 = vcmp.gt.f32.partialorder %v199, 0.0
    %vm216 = vcmp.gt.f32.partialorder %v200, 0.0
    %vm217 = vcmp.gt.f32.partialorder %v201, 0.0
    %vm218 = vcmp.gt.f32.partialorder %v202, 0.0
    %vm219 = vcmp.gt.f32.partialorder %v203, 0.0
    %vm220 = vcmp.gt.f32.partialorder %v204, 0.0
    %vm221 = vcmp.gt.f32.partialorder %v205, 0.0
    %vm222 = vcmp.gt.f32.partialorder %v206, 0.0
    %vm223 = vcmp.lt.f32.partialorder %v191, 0.0
    %vm224 = vcmp.lt.f32.partialorder %v192, 0.0
    %vm225 = vcmp.lt.f32.partialorder %v193, 0.0
    %vm226 = vcmp.lt.f32.partialorder %v194, 0.0
    %vm227 = vcmp.lt.f32.partialorder %v195, 0.0
    %vm228 = vcmp.lt.f32.partialorder %v196, 0.0
    %vm229 = vcmp.lt.f32.partialorder %v197, 0.0
    %vm230 = vcmp.lt.f32.partialorder %v198, 0.0
    %vm231 = vcmp.lt.f32.partialorder %v199, 0.0
    %vm232 = vcmp.lt.f32.partialorder %v200, 0.0
    %vm233 = vcmp.lt.f32.partialorder %v201, 0.0
    %vm234 = vcmp.lt.f32.partialorder %v202, 0.0
    %vm235 = vcmp.lt.f32.partialorder %v203, 0.0
    %vm236 = vcmp.lt.f32.partialorder %v204, 0.0
    %vm237 = vcmp.lt.f32.partialorder %v205, 0.0
    %vm238 = vcmp.lt.f32.partialorder %v206, 0.0
    %v239 = vsel %vm223, -1.0, 0.0
    %v240 = vsel %vm224, -1.0, 0.0
    %v241 = vsel %vm225, -1.0, 0.0
    %v242 = vsel %vm226, -1.0, 0.0
    %v243 = vsel %vm227, -1.0, 0.0
    %v244 = vsel %vm228, -1.0, 0.0
    %v245 = vsel %vm229, -1.0, 0.0
    %v246 = vsel %vm230, -1.0, 0.0
    %v247 = vsel %vm231, -1.0, 0.0
    %v248 = vsel %vm232, -1.0, 0.0
    %v249 = vsel %vm233, -1.0, 0.0
    %v250 = vsel %vm234, -1.0, 0.0
    %v251 = vsel %vm235, -1.0, 0.0
    %v252 = vsel %vm236, -1.0, 0.0
    %v253 = vsel %vm237, -1.0, 0.0
    %v254 = vsel %vm238, -1.0, 0.0
    %v255 = vsel %vm207, 1.0, %v239
    %v256 = vsel %vm208, 1.0, %v240
    %v257 = vsel %vm209, 1.0, %v241
    %v258 = vsel %vm210, 1.0, %v242
    %v259 = vsel %vm211, 1.0, %v243
    %v260 = vsel %vm212, 1.0, %v244
    %v261 = vsel %vm213, 1.0, %v245
    %v262 = vsel %vm214, 1.0, %v246
    %v263 = vsel %vm215, 1.0, %v247
    %v264 = vsel %vm216, 1.0, %v248
    %v265 = vsel %vm217, 1.0, %v249
    %v266 = vsel %vm218, 1.0, %v250
    %v267 = vsel %vm219, 1.0, %v251
    %v268 = vsel %vm220, 1.0, %v252
    %v269 = vsel %vm221, 1.0, %v253
    %v270 = vsel %vm222, 1.0, %v254
    %271 = vst [vmem:[#allocation2] sm:$0xff] 0.0
    %272 = vst [vmem:[#allocation2 + $0x8] sm:$0x3] 0.0
    %273 = vst [vmem:[#allocation2 + $0xa0] sm:$0xff] 0.0
    %274 = vst [vmem:[#allocation2 + $0xa8] sm:$0x3] 0.0
    %s275 = scalar_lea.vmem [#allocation2], 144
    %276 = vst [vmem:[%s275] sm:$0xff] 0.0
    %277 = vst [vmem:[%s275 + $0x8] sm:$0x3] 0.0
    %278 = vst [vmem:[%s275 + $0xa0] sm:$0xff] 0.0
    %279 = vst [vmem:[%s275 + $0xa8] sm:$0x3] 0.0
    %280 = vst [vmem:[#allocation2] sm:$0x1] 0.0
    %281 = vst [vmem:[#allocation2 + $0x10] sm:$0x1] 0.0
    %282 = vst [vmem:[#allocation2 + $0x20] sm:$0x1] 0.0
    %283 = vst [vmem:[#allocation2 + $0x30] sm:$0x1] 0.0
    %284 = vst [vmem:[#allocation2 + $0x40] sm:$0x1] 0.0
    %285 = vst [vmem:[#allocation2 + $0x50] sm:$0x1] 0.0
    %286 = vst [vmem:[#allocation2 + $0x60] sm:$0x1] 0.0
    %287 = vst [vmem:[#allocation2 + $0x70] sm:$0x1] 0.0
    %288 = vst [vmem:[#allocation2 + $0x80] sm:$0x1] 0.0
    %289 = vst [vmem:[#allocation2 + $0x90] sm:$0x1] 0.0
    %290 = vst [vmem:[#allocation2 + $0xa0] sm:$0x1] 0.0
    %291 = vst [vmem:[#allocation2 + $0xb0] sm:$0x1] 0.0
    %292 = vst [vmem:[#allocation2 + $0xc0] sm:$0x1] 0.0
    %293 = vst [vmem:[#allocation2 + $0xd0] sm:$0x1] 0.0
    %294 = vst [vmem:[#allocation2 + $0xe0] sm:$0x1] 0.0
    %295 = vst [vmem:[#allocation2 + $0xf0] sm:$0x1] 0.0
    %296 = vst [vmem:[#allocation2 + $0x100] sm:$0x1] 0.0
    %297 = vst [vmem:[#allocation2 + $0x110] sm:$0x1] 0.0
    %298 = vst [vmem:[#allocation2 + $0x120] sm:$0x1] 0.0
    %299 = vst [vmem:[#allocation2 + $0x130] sm:$0x1] 0.0
    %300 = vst [vmem:[#allocation2 + $0x9] sm:$0x1] 0.0
    %301 = vst [vmem:[#allocation2 + $0x19] sm:$0x1] 0.0
    %302 = vst [vmem:[#allocation2 + $0x29] sm:$0x1] 0.0
    %303 = vst [vmem:[#allocation2 + $0x39] sm:$0x1] 0.0
    %304 = vst [vmem:[#allocation2 + $0x49] sm:$0x1] 0.0
    %305 = vst [vmem:[#allocation2 + $0x59] sm:$0x1] 0.0
    %306 = vst [vmem:[#allocation2 + $0x69] sm:$0x1] 0.0
    %307 = vst [vmem:[#allocation2 + $0x79] sm:$0x1] 0.0
    %308 = vst [vmem:[#allocation2 + $0x89] sm:$0x1] 0.0
    %309 = vst [vmem:[#allocation2 + $0x99] sm:$0x1] 0.0
    %310 = vst [vmem:[#allocation2 + $0xa9] sm:$0x1] 0.0
    %311 = vst [vmem:[#allocation2 + $0xb9] sm:$0x1] 0.0
    %312 = vst [vmem:[#allocation2 + $0xc9] sm:$0x1] 0.0
    %313 = vst [vmem:[#allocation2 + $0xd9] sm:$0x1] 0.0
    %314 = vst [vmem:[#allocation2 + $0xe9] sm:$0x1] 0.0
    %315 = vst [vmem:[#allocation2 + $0xf9] sm:$0x1] 0.0
    %316 = vst [vmem:[#allocation2 + $0x109] sm:$0x1] 0.0
    %317 = vst [vmem:[#allocation2 + $0x119] sm:$0x1] 0.0
    %318 = vst [vmem:[#allocation2 + $0x129] sm:$0x1] 0.0
    %319 = vst [vmem:[#allocation2 + $0x139] sm:$0x1] 0.0
    %s320 = scalar_lea.vmem [#allocation2], 16
    %321 = vst [vmem:[%s320 + $0x1] sm:$0xff] %v255
    %322 = vst [vmem:[%s320 + $0x11] sm:$0xff] %v256
    %323 = vst [vmem:[%s320 + $0x21] sm:$0xff] %v257
    %324 = vst [vmem:[%s320 + $0x31] sm:$0xff] %v258
    %325 = vst [vmem:[%s320 + $0x41] sm:$0xff] %v259
    %326 = vst [vmem:[%s320 + $0x51] sm:$0xff] %v260
    %327 = vst [vmem:[%s320 + $0x61] sm:$0xff] %v261
    %328 = vst [vmem:[%s320 + $0x71] sm:$0xff] %v262
    %329 = vst [vmem:[%s320 + $0xa1] sm:$0xff] %v263
    %330 = vst [vmem:[%s320 + $0xb1] sm:$0xff] %v264
    %331 = vst [vmem:[%s320 + $0xc1] sm:$0xff] %v265
    %332 = vst [vmem:[%s320 + $0xd1] sm:$0xff] %v266
    %333 = vst [vmem:[%s320 + $0xe1] sm:$0xff] %v267
    %334 = vst [vmem:[%s320 + $0xf1] sm:$0xff] %v268
    %335 = vst [vmem:[%s320 + $0x101] sm:$0xff] %v269
    %336 = vst [vmem:[%s320 + $0x111] sm:$0xff] %v270
    %v337 = vld [vmem:[#allocation2] sm:$0xff]
    %v338 = vld [vmem:[#allocation2 + $0x10] sm:$0xff]
    %v339 = vld [vmem:[#allocation2 + $0x20] sm:$0xff]
    %v340 = vld [vmem:[#allocation2 + $0x30] sm:$0xff]
    %v341 = vld [vmem:[#allocation2 + $0x40] sm:$0xff]
    %v342 = vld [vmem:[#allocation2 + $0x50] sm:$0xff]
    %v343 = vld [vmem:[#allocation2 + $0x60] sm:$0xff]
    %v344 = vld [vmem:[#allocation2 + $0x70] sm:$0xff]
    %v345 = vld [vmem:[#allocation2 + $0xa0] sm:$0xff]
    %v346 = vld [vmem:[#allocation2 + $0xb0] sm:$0xff]
    %v347 = vld [vmem:[#allocation2 + $0xc0] sm:$0xff]
    %v348 = vld [vmem:[#allocation2 + $0xd0] sm:$0xff]
    %v349 = vld [vmem:[#allocation2 + $0xe0] sm:$0xff]
    %v350 = vld [vmem:[#allocation2 + $0xf0] sm:$0xff]
    %v351 = vld [vmem:[#allocation2 + $0x100] sm:$0xff]
    %v352 = vld [vmem:[#allocation2 + $0x110] sm:$0xff]
    %v353 = vpack.c.bf16 %v337, %v337
    %v354 = vpack.c.bf16 %v338, %v338
    %v355 = vpack.c.bf16 %v339, %v339
    %v356 = vpack.c.bf16 %v340, %v340
    %v357 = vpack.c.bf16 %v341, %v341
    %v358 = vpack.c.bf16 %v342, %v342
    %v359 = vpack.c.bf16 %v343, %v343
    %v360 = vpack.c.bf16 %v344, %v344
    %v361 = vpack.c.bf16 %v345, %v345
    %v362 = vpack.c.bf16 %v346, %v346
    %v363 = vpack.c.bf16 %v347, %v347
    %v364 = vpack.c.bf16 %v348, %v348
    %v365 = vpack.c.bf16 %v349, %v349
    %v366 = vpack.c.bf16 %v350, %v350
    %v367 = vpack.c.bf16 %v351, %v351
    %v368 = vpack.c.bf16 %v352, %v352
    %v369 = vld [vmem:[#allocation2 + $0x1] sm:$0xff]
    %v370 = vld [vmem:[#allocation2 + $0x11] sm:$0xff]
    %v371 = vld [vmem:[#allocation2 + $0x21] sm:$0xff]
    %v372 = vld [vmem:[#allocation2 + $0x31] sm:$0xff]
    %v373 = vld [vmem:[#allocation2 + $0x41] sm:$0xff]
    %v374 = vld [vmem:[#allocation2 + $0x51] sm:$0xff]
    %v375 = vld [vmem:[#allocation2 + $0x61] sm:$0xff]
    %v376 = vld [vmem:[#allocation2 + $0x71] sm:$0xff]
    %v377 = vld [vmem:[#allocation2 + $0xa1] sm:$0xff]
    %v378 = vld [vmem:[#allocation2 + $0xb1] sm:$0xff]
    %v379 = vld [vmem:[#allocation2 + $0xc1] sm:$0xff]
    %v380 = vld [vmem:[#allocation2 + $0xd1] sm:$0xff]
    %v381 = vld [vmem:[#allocation2 + $0xe1] sm:$0xff]
    %v382 = vld [vmem:[#allocation2 + $0xf1] sm:$0xff]
    %v383 = vld [vmem:[#allocation2 + $0x101] sm:$0xff]
    %v384 = vld [vmem:[#allocation2 + $0x111] sm:$0xff]
    %v385 = vpack.c.bf16 %v369, %v369
    %v386 = vpack.c.bf16 %v370, %v370
    %v387 = vpack.c.bf16 %v371, %v371
    %v388 = vpack.c.bf16 %v372, %v372
    %v389 = vpack.c.bf16 %v373, %v373
    %v390 = vpack.c.bf16 %v374, %v374
    %v391 = vpack.c.bf16 %v375, %v375
    %v392 = vpack.c.bf16 %v376, %v376
    %v393 = vpack.c.bf16 %v377, %v377
    %v394 = vpack.c.bf16 %v378, %v378
    %v395 = vpack.c.bf16 %v379, %v379
    %v396 = vpack.c.bf16 %v380, %v380
    %v397 = vpack.c.bf16 %v381, %v381
    %v398 = vpack.c.bf16 %v382, %v382
    %v399 = vpack.c.bf16 %v383, %v383
    %v400 = vpack.c.bf16 %v384, %v384
    %v401 = vld [vmem:[#allocation2 + $0x2] sm:$0xff]
    %v402 = vld [vmem:[#allocation2 + $0x12] sm:$0xff]
    %v403 = vld [vmem:[#allocation2 + $0x22] sm:$0xff]
    %v404 = vld [vmem:[#allocation2 + $0x32] sm:$0xff]
    %v405 = vld [vmem:[#allocation2 + $0x42] sm:$0xff]
    %v406 = vld [vmem:[#allocation2 + $0x52] sm:$0xff]
    %v407 = vld [vmem:[#allocation2 + $0x62] sm:$0xff]
    %v408 = vld [vmem:[#allocation2 + $0x72] sm:$0xff]
    %v409 = vld [vmem:[#allocation2 + $0xa2] sm:$0xff]
    %v410 = vld [vmem:[#allocation2 + $0xb2] sm:$0xff]
    %v411 = vld [vmem:[#allocation2 + $0xc2] sm:$0xff]
    %v412 = vld [vmem:[#allocation2 + $0xd2] sm:$0xff]
    %v413 = vld [vmem:[#allocation2 + $0xe2] sm:$0xff]
    %v414 = vld [vmem:[#allocation2 + $0xf2] sm:$0xff]
    %v415 = vld [vmem:[#allocation2 + $0x102] sm:$0xff]
    %v416 = vld [vmem:[#allocation2 + $0x112] sm:$0xff]
    %v417 = vpack.c.bf16 %v401, %v401
    %v418 = vpack.c.bf16 %v402, %v402
    %v419 = vpack.c.bf16 %v403, %v403
    %v420 = vpack.c.bf16 %v404, %v404
    %v421 = vpack.c.bf16 %v405, %v405
    %v422 = vpack.c.bf16 %v406, %v406
    %v423 = vpack.c.bf16 %v407, %v407
    %v424 = vpack.c.bf16 %v408, %v408
    %v425 = vpack.c.bf16 %v409, %v409
    %v426 = vpack.c.bf16 %v410, %v410
    %v427 = vpack.c.bf16 %v411, %v411
    %v428 = vpack.c.bf16 %v412, %v412
    %v429 = vpack.c.bf16 %v413, %v413
    %v430 = vpack.c.bf16 %v414, %v414
    %v431 = vpack.c.bf16 %v415, %v415
    %v432 = vpack.c.bf16 %v416, %v416
    %v433 = vld [vmem:[%s320] sm:$0xff]
    %v434 = vld [vmem:[%s320 + $0x10] sm:$0xff]
    %v435 = vld [vmem:[%s320 + $0x20] sm:$0xff]
    %v436 = vld [vmem:[%s320 + $0x30] sm:$0xff]
    %v437 = vld [vmem:[%s320 + $0x40] sm:$0xff]
    %v438 = vld [vmem:[%s320 + $0x50] sm:$0xff]
    %v439 = vld [vmem:[%s320 + $0x60] sm:$0xff]
    %v440 = vld [vmem:[%s320 + $0x70] sm:$0xff]
    %v441 = vld [vmem:[%s320 + $0xa0] sm:$0xff]
    %v442 = vld [vmem:[%s320 + $0xb0] sm:$0xff]
    %v443 = vld [vmem:[%s320 + $0xc0] sm:$0xff]
    %v444 = vld [vmem:[%s320 + $0xd0] sm:$0xff]
    %v445 = vld [vmem:[%s320 + $0xe0] sm:$0xff]
    %v446 = vld [vmem:[%s320 + $0xf0] sm:$0xff]
    %v447 = vld [vmem:[%s320 + $0x100] sm:$0xff]
    %v448 = vld [vmem:[%s320 + $0x110] sm:$0xff]
    %v449 = vpack.c.bf16 %v433, %v433
    %v450 = vpack.c.bf16 %v434, %v434
    %v451 = vpack.c.bf16 %v435, %v435
    %v452 = vpack.c.bf16 %v436, %v436
    %v453 = vpack.c.bf16 %v437, %v437
    %v454 = vpack.c.bf16 %v438, %v438
    %v455 = vpack.c.bf16 %v439, %v439
    %v456 = vpack.c.bf16 %v440, %v440
    %v457 = vpack.c.bf16 %v441, %v441
    %v458 = vpack.c.bf16 %v442, %v442
    %v459 = vpack.c.bf16 %v443, %v443
    %v460 = vpack.c.bf16 %v444, %v444
    %v461 = vpack.c.bf16 %v445, %v445
    %v462 = vpack.c.bf16 %v446, %v446
    %v463 = vpack.c.bf16 %v447, %v447
    %v464 = vpack.c.bf16 %v448, %v448
    %v465 = vld [vmem:[%s320 + $0x1] sm:$0xff]
    %v466 = vld [vmem:[%s320 + $0x11] sm:$0xff]
    %v467 = vld [vmem:[%s320 + $0x21] sm:$0xff]
    %v468 = vld [vmem:[%s320 + $0x31] sm:$0xff]
    %v469 = vld [vmem:[%s320 + $0x41] sm:$0xff]
    %v470 = vld [vmem:[%s320 + $0x51] sm:$0xff]
    %v471 = vld [vmem:[%s320 + $0x61] sm:$0xff]
    %v472 = vld [vmem:[%s320 + $0x71] sm:$0xff]
    %v473 = vld [vmem:[%s320 + $0xa1] sm:$0xff]
    %v474 = vld [vmem:[%s320 + $0xb1] sm:$0xff]
    %v475 = vld [vmem:[%s320 + $0xc1] sm:$0xff]
    %v476 = vld [vmem:[%s320 + $0xd1] sm:$0xff]
    %v477 = vld [vmem:[%s320 + $0xe1] sm:$0xff]
    %v478 = vld [vmem:[%s320 + $0xf1] sm:$0xff]
    %v479 = vld [vmem:[%s320 + $0x101] sm:$0xff]
    %v480 = vld [vmem:[%s320 + $0x111] sm:$0xff]
    %v481 = vpack.c.bf16 %v465, %v465
    %v482 = vpack.c.bf16 %v466, %v466
    %v483 = vpack.c.bf16 %v467, %v467
    %v484 = vpack.c.bf16 %v468, %v468
    %v485 = vpack.c.bf16 %v469, %v469
    %v486 = vpack.c.bf16 %v470, %v470
    %v487 = vpack.c.bf16 %v471, %v471
    %v488 = vpack.c.bf16 %v472, %v472
    %v489 = vpack.c.bf16 %v473, %v473
    %v490 = vpack.c.bf16 %v474, %v474
    %v491 = vpack.c.bf16 %v475, %v475
    %v492 = vpack.c.bf16 %v476, %v476
    %v493 = vpack.c.bf16 %v477, %v477
    %v494 = vpack.c.bf16 %v478, %v478
    %v495 = vpack.c.bf16 %v479, %v479
    %v496 = vpack.c.bf16 %v480, %v480
    %v497 = vld [vmem:[%s320 + $0x2] sm:$0xff]
    %v498 = vld [vmem:[%s320 + $0x12] sm:$0xff]
    %v499 = vld [vmem:[%s320 + $0x22] sm:$0xff]
    %v500 = vld [vmem:[%s320 + $0x32] sm:$0xff]
    %v501 = vld [vmem:[%s320 + $0x42] sm:$0xff]
    %v502 = vld [vmem:[%s320 + $0x52] sm:$0xff]
    %v503 = vld [vmem:[%s320 + $0x62] sm:$0xff]
    %v504 = vld [vmem:[%s320 + $0x72] sm:$0xff]
    %v505 = vld [vmem:[%s320 + $0xa2] sm:$0xff]
    %v506 = vld [vmem:[%s320 + $0xb2] sm:$0xff]
    %v507 = vld [vmem:[%s320 + $0xc2] sm:$0xff]
    %v508 = vld [vmem:[%s320 + $0xd2] sm:$0xff]
    %v509 = vld [vmem:[%s320 + $0xe2] sm:$0xff]
    %v510 = vld [vmem:[%s320 + $0xf2] sm:$0xff]
    %v511 = vld [vmem:[%s320 + $0x102] sm:$0xff]
    %v512 = vld [vmem:[%s320 + $0x112] sm:$0xff]
    %v513 = vpack.c.bf16 %v497, %v497
    %v514 = vpack.c.bf16 %v498, %v498
    %v515 = vpack.c.bf16 %v499, %v499
    %v516 = vpack.c.bf16 %v500, %v500
    %v517 = vpack.c.bf16 %v501, %v501
    %v518 = vpack.c.bf16 %v502, %v502
    %v519 = vpack.c.bf16 %v503, %v503
    %v520 = vpack.c.bf16 %v504, %v504
    %v521 = vpack.c.bf16 %v505, %v505
    %v522 = vpack.c.bf16 %v506, %v506
    %v523 = vpack.c.bf16 %v507, %v507
    %v524 = vpack.c.bf16 %v508, %v508
    %v525 = vpack.c.bf16 %v509, %v509
    %v526 = vpack.c.bf16 %v510, %v510
    %v527 = vpack.c.bf16 %v511, %v511
    %v528 = vpack.c.bf16 %v512, %v512
    %s529 = scalar_lea.vmem [#allocation2], 32
    %v530 = vld [vmem:[%s529] sm:$0xff]
    %v531 = vld [vmem:[%s529 + $0x10] sm:$0xff]
    %v532 = vld [vmem:[%s529 + $0x20] sm:$0xff]
    %v533 = vld [vmem:[%s529 + $0x30] sm:$0xff]
    %v534 = vld [vmem:[%s529 + $0x40] sm:$0xff]
    %v535 = vld [vmem:[%s529 + $0x50] sm:$0xff]
    %v536 = vld [vmem:[%s529 + $0x60] sm:$0xff]
    %v537 = vld [vmem:[%s529 + $0x70] sm:$0xff]
    %v538 = vld [vmem:[%s529 + $0xa0] sm:$0xff]
    %v539 = vld [vmem:[%s529 + $0xb0] sm:$0xff]
    %v540 = vld [vmem:[%s529 + $0xc0] sm:$0xff]
    %v541 = vld [vmem:[%s529 + $0xd0] sm:$0xff]
    %v542 = vld [vmem:[%s529 + $0xe0] sm:$0xff]
    %v543 = vld [vmem:[%s529 + $0xf0] sm:$0xff]
    %v544 = vld [vmem:[%s529 + $0x100] sm:$0xff]
    %v545 = vld [vmem:[%s529 + $0x110] sm:$0xff]
    %v546 = vpack.c.bf16 %v530, %v530
    %v547 = vpack.c.bf16 %v531, %v531
    %v548 = vpack.c.bf16 %v532, %v532
    %v549 = vpack.c.bf16 %v533, %v533
    %v550 = vpack.c.bf16 %v534, %v534
    %v551 = vpack.c.bf16 %v535, %v535
    %v552 = vpack.c.bf16 %v536, %v536
    %v553 = vpack.c.bf16 %v537, %v537
    %v554 = vpack.c.bf16 %v538, %v538
    %v555 = vpack.c.bf16 %v539, %v539
    %v556 = vpack.c.bf16 %v540, %v540
    %v557 = vpack.c.bf16 %v541, %v541
    %v558 = vpack.c.bf16 %v542, %v542
    %v559 = vpack.c.bf16 %v543, %v543
    %v560 = vpack.c.bf16 %v544, %v544
    %v561 = vpack.c.bf16 %v545, %v545
    %v562 = vld [vmem:[%s529 + $0x1] sm:$0xff]
    %v563 = vld [vmem:[%s529 + $0x11] sm:$0xff]
    %v564 = vld [vmem:[%s529 + $0x21] sm:$0xff]
    %v565 = vld [vmem:[%s529 + $0x31] sm:$0xff]
    %v566 = vld [vmem:[%s529 + $0x41] sm:$0xff]
    %v567 = vld [vmem:[%s529 + $0x51] sm:$0xff]
    %v568 = vld [vmem:[%s529 + $0x61] sm:$0xff]
    %v569 = vld [vmem:[%s529 + $0x71] sm:$0xff]
    %v570 = vld [vmem:[%s529 + $0xa1] sm:$0xff]
    %v571 = vld [vmem:[%s529 + $0xb1] sm:$0xff]
    %v572 = vld [vmem:[%s529 + $0xc1] sm:$0xff]
    %v573 = vld [vmem:[%s529 + $0xd1] sm:$0xff]
    %v574 = vld [vmem:[%s529 + $0xe1] sm:$0xff]
    %v575 = vld [vmem:[%s529 + $0xf1] sm:$0xff]
    %v576 = vld [vmem:[%s529 + $0x101] sm:$0xff]
    %v577 = vld [vmem:[%s529 + $0x111] sm:$0xff]
    %v578 = vpack.c.bf16 %v562, %v562
    %v579 = vpack.c.bf16 %v563, %v563
    %v580 = vpack.c.bf16 %v564, %v564
    %v581 = vpack.c.bf16 %v565, %v565
    %v582 = vpack.c.bf16 %v566, %v566
    %v583 = vpack.c.bf16 %v567, %v567
    %v584 = vpack.c.bf16 %v568, %v568
    %v585 = vpack.c.bf16 %v569, %v569
    %v586 = vpack.c.bf16 %v570, %v570
    %v587 = vpack.c.bf16 %v571, %v571
    %v588 = vpack.c.bf16 %v572, %v572
    %v589 = vpack.c.bf16 %v573, %v573
    %v590 = vpack.c.bf16 %v574, %v574
    %v591 = vpack.c.bf16 %v575, %v575
    %v592 = vpack.c.bf16 %v576, %v576
    %v593 = vpack.c.bf16 %v577, %v577
    %v594 = vld [vmem:[%s529 + $0x2] sm:$0xff]
    %v595 = vld [vmem:[%s529 + $0x12] sm:$0xff]
    %v596 = vld [vmem:[%s529 + $0x22] sm:$0xff]
    %v597 = vld [vmem:[%s529 + $0x32] sm:$0xff]
    %v598 = vld [vmem:[%s529 + $0x42] sm:$0xff]
    %v599 = vld [vmem:[%s529 + $0x52] sm:$0xff]
    %v600 = vld [vmem:[%s529 + $0x62] sm:$0xff]
    %v601 = vld [vmem:[%s529 + $0x72] sm:$0xff]
    %v602 = vld [vmem:[%s529 + $0xa2] sm:$0xff]
    %v603 = vld [vmem:[%s529 + $0xb2] sm:$0xff]
    %v604 = vld [vmem:[%s529 + $0xc2] sm:$0xff]
    %v605 = vld [vmem:[%s529 + $0xd2] sm:$0xff]
    %v606 = vld [vmem:[%s529 + $0xe2] sm:$0xff]
    %v607 = vld [vmem:[%s529 + $0xf2] sm:$0xff]
    %v608 = vld [vmem:[%s529 + $0x102] sm:$0xff]
    %v609 = vld [vmem:[%s529 + $0x112] sm:$0xff]
    %v610 = vpack.c.bf16 %v594, %v594
    %v611 = vpack.c.bf16 %v595, %v595
    %v612 = vpack.c.bf16 %v596, %v596
    %v613 = vpack.c.bf16 %v597, %v597
    %v614 = vpack.c.bf16 %v598, %v598
    %v615 = vpack.c.bf16 %v599, %v599
    %v616 = vpack.c.bf16 %v600, %v600
    %v617 = vpack.c.bf16 %v601, %v601
    %v618 = vpack.c.bf16 %v602, %v602
    %v619 = vpack.c.bf16 %v603, %v603
    %v620 = vpack.c.bf16 %v604, %v604
    %v621 = vpack.c.bf16 %v605, %v605
    %v622 = vpack.c.bf16 %v606, %v606
    %v623 = vpack.c.bf16 %v607, %v607
    %v624 = vpack.c.bf16 %v608, %v608
    %v625 = vpack.c.bf16 %v609, %v609
    %v626 = vld [vmem:[#allocation6] sm:$0xf]
    %v627 = vld [vmem:[#allocation6 + $0x4] sm:$0xf]
    %v628 = vld [vmem:[#allocation6 + $0x8] sm:$0xf]
    %v629 = vld [vmem:[#allocation6 + $0xc] sm:$0xf]
    %v630 = vld [vmem:[#allocation6 + $0x10] sm:$0xf]
    %v631 = vld [vmem:[#allocation6 + $0x14] sm:$0xf]
    %v632 = vld [vmem:[#allocation6 + $0x18] sm:$0xf]
    %v633 = vld [vmem:[#allocation6 + $0x1c] sm:$0xf]
    %v634 = vld [vmem:[#allocation6 + $0x20] sm:$0xf]
    %v635 = vld [vmem:[#allocation6 + $0x24] sm:$0xf]
    %v636 = vld [vmem:[#allocation6 + $0x28] sm:$0xf]
    %v637 = vld [vmem:[#allocation6 + $0x2c] sm:$0xf]
    %v638 = vld [vmem:[#allocation6 + $0x30] sm:$0xf]
    %v639 = vld [vmem:[#allocation6 + $0x34] sm:$0xf]
    %v640 = vld [vmem:[#allocation6 + $0x38] sm:$0xf]
    %v641 = vld [vmem:[#allocation6 + $0x3c] sm:$0xf]
    %v642 = vld [vmem:[#allocation6 + $0x40] sm:$0xf]
    %v643 = vld [vmem:[#allocation6 + $0x44] sm:$0xf]
    %v644 = vld [vmem:[#allocation6 + $0x48] sm:$0xf]
    %v645 = vld [vmem:[#allocation6 + $0x4c] sm:$0xf]
    %v646 = vld [vmem:[#allocation6 + $0x50] sm:$0xf]
    %v647 = vld [vmem:[#allocation6 + $0x54] sm:$0xf]
    %v648 = vld [vmem:[#allocation6 + $0x58] sm:$0xf]
    %v649 = vld [vmem:[#allocation6 + $0x5c] sm:$0xf]
    %v650 = vld [vmem:[#allocation6 + $0x60] sm:$0xf]
    %v651 = vld [vmem:[#allocation6 + $0x64] sm:$0xf]
    %v652 = vld [vmem:[#allocation6 + $0x68] sm:$0xf]
    %v653 = vld [vmem:[#allocation6 + $0x6c] sm:$0xf]
    %v654 = vld [vmem:[#allocation6 + $0x70] sm:$0xf]
    %v655 = vld [vmem:[#allocation6 + $0x74] sm:$0xf]
    %v656 = vld [vmem:[#allocation6 + $0x78] sm:$0xf]
    %v657 = vld [vmem:[#allocation6 + $0x7c] sm:$0xf]
    %v658 = vld [vmem:[#allocation6 + $0x80] sm:$0xf]
    %v659 = vld [vmem:[#allocation6 + $0x84] sm:$0xf]
    %v660 = vld [vmem:[#allocation6 + $0x88] sm:$0xf]
    %v661 = vld [vmem:[#allocation6 + $0x8c] sm:$0xf]
    %v662 = vld [vmem:[#allocation6 + $0x90] sm:$0xf]
    %v663 = vld [vmem:[#allocation6 + $0x94] sm:$0xf]
    %v664 = vld [vmem:[#allocation6 + $0x98] sm:$0xf]
    %v665 = vld [vmem:[#allocation6 + $0x9c] sm:$0xf]
    %v666 = vld [vmem:[#allocation6 + $0xa0] sm:$0xf]
    %v667 = vld [vmem:[#allocation6 + $0xa4] sm:$0xf]
    %v668 = vld [vmem:[#allocation6 + $0xa8] sm:$0xf]
    %v669 = vld [vmem:[#allocation6 + $0xac] sm:$0xf]
    %v670 = vld [vmem:[#allocation6 + $0xb0] sm:$0xf]
    %v671 = vld [vmem:[#allocation6 + $0xb4] sm:$0xf]
    %v672 = vld [vmem:[#allocation6 + $0xb8] sm:$0xf]
    %v673 = vld [vmem:[#allocation6 + $0xbc] sm:$0xf]
    %v674 = vld [vmem:[#allocation6 + $0xc0] sm:$0xf]
    %v675 = vld [vmem:[#allocation6 + $0xc4] sm:$0xf]
    %v676 = vld [vmem:[#allocation6 + $0xc8] sm:$0xf]
    %v677 = vld [vmem:[#allocation6 + $0xcc] sm:$0xf]
    %v678 = vld [vmem:[#allocation6 + $0xd0] sm:$0xf]
    %v679 = vld [vmem:[#allocation6 + $0xd4] sm:$0xf]
    %v680 = vld [vmem:[#allocation6 + $0xd8] sm:$0xf]
    %v681 = vld [vmem:[#allocation6 + $0xdc] sm:$0xf]
    %v682 = vld [vmem:[#allocation6 + $0xe0] sm:$0xf]
    %v683 = vld [vmem:[#allocation6 + $0xe4] sm:$0xf]
    %v684 = vld [vmem:[#allocation6 + $0xe8] sm:$0xf]
    %v685 = vld [vmem:[#allocation6 + $0xec] sm:$0xf]
    %v686 = vld [vmem:[#allocation6 + $0xf0] sm:$0xf]
    %v687 = vld [vmem:[#allocation6 + $0xf4] sm:$0xf]
    %v688 = vld [vmem:[#allocation6 + $0xf8] sm:$0xf]
    %v689 = vld [vmem:[#allocation6 + $0xfc] sm:$0xf]
    %v690 = vld [vmem:[#allocation6 + $0x100] sm:$0xf]
    %v691 = vld [vmem:[#allocation6 + $0x104] sm:$0xf]
    %v692 = vld [vmem:[#allocation6 + $0x108] sm:$0xf]
    %v693 = vld [vmem:[#allocation6 + $0x10c] sm:$0xf]
    %v694 = vld [vmem:[#allocation6 + $0x110] sm:$0xf]
    %v695 = vld [vmem:[#allocation6 + $0x114] sm:$0xf]
    %v696 = vld [vmem:[#allocation6 + $0x118] sm:$0xf]
    %v697 = vld [vmem:[#allocation6 + $0x11c] sm:$0xf]
    %v698 = vld [vmem:[#allocation6 + $0x120] sm:$0xf]
    %v699 = vld [vmem:[#allocation6 + $0x124] sm:$0xf]
    %v700 = vld [vmem:[#allocation6 + $0x128] sm:$0xf]
    %v701 = vld [vmem:[#allocation6 + $0x12c] sm:$0xf]
    %v702 = vld [vmem:[#allocation6 + $0x130] sm:$0xf]
    %v703 = vld [vmem:[#allocation6 + $0x134] sm:$0xf]
    %v704 = vld [vmem:[#allocation6 + $0x138] sm:$0xf]
    %v705 = vld [vmem:[#allocation6 + $0x13c] sm:$0xf]
    %v706 = vld [vmem:[#allocation6 + $0x140] sm:$0xf]
    %v707 = vld [vmem:[#allocation6 + $0x144] sm:$0xf]
    %v708 = vld [vmem:[#allocation6 + $0x148] sm:$0xf]
    %v709 = vld [vmem:[#allocation6 + $0x14c] sm:$0xf]
    %v710 = vld [vmem:[#allocation6 + $0x150] sm:$0xf]
    %v711 = vld [vmem:[#allocation6 + $0x154] sm:$0xf]
    %v712 = vld [vmem:[#allocation6 + $0x158] sm:$0xf]
    %v713 = vld [vmem:[#allocation6 + $0x15c] sm:$0xf]
    %v714 = vld [vmem:[#allocation6 + $0x160] sm:$0xf]
    %v715 = vld [vmem:[#allocation6 + $0x164] sm:$0xf]
    %v716 = vld [vmem:[#allocation6 + $0x168] sm:$0xf]
    %v717 = vld [vmem:[#allocation6 + $0x16c] sm:$0xf]
    %v718 = vld [vmem:[#allocation6 + $0x170] sm:$0xf]
    %v719 = vld [vmem:[#allocation6 + $0x174] sm:$0xf]
    %v720 = vld [vmem:[#allocation6 + $0x178] sm:$0xf]
    %v721 = vld [vmem:[#allocation6 + $0x17c] sm:$0xf]
    %v722 = vld [vmem:[#allocation6 + $0x180] sm:$0xf]
    %v723 = vld [vmem:[#allocation6 + $0x184] sm:$0xf]
    %v724 = vld [vmem:[#allocation6 + $0x188] sm:$0xf]
    %v725 = vld [vmem:[#allocation6 + $0x18c] sm:$0xf]
    %v726 = vld [vmem:[#allocation6 + $0x190] sm:$0xf]
    %v727 = vld [vmem:[#allocation6 + $0x194] sm:$0xf]
    %v728 = vld [vmem:[#allocation6 + $0x198] sm:$0xf]
    %v729 = vld [vmem:[#allocation6 + $0x19c] sm:$0xf]
    %v730 = vld [vmem:[#allocation6 + $0x1a0] sm:$0xf]
    %v731 = vld [vmem:[#allocation6 + $0x1a4] sm:$0xf]
    %v732 = vld [vmem:[#allocation6 + $0x1a8] sm:$0xf]
    %v733 = vld [vmem:[#allocation6 + $0x1ac] sm:$0xf]
    %v734 = vld [vmem:[#allocation6 + $0x1b0] sm:$0xf]
    %v735 = vld [vmem:[#allocation6 + $0x1b4] sm:$0xf]
    %v736 = vld [vmem:[#allocation6 + $0x1b8] sm:$0xf]
    %v737 = vld [vmem:[#allocation6 + $0x1bc] sm:$0xf]
    %v738 = vld [vmem:[#allocation6 + $0x1c0] sm:$0xf]
    %v739 = vld [vmem:[#allocation6 + $0x1c4] sm:$0xf]
    %v740 = vld [vmem:[#allocation6 + $0x1c8] sm:$0xf]
    %v741 = vld [vmem:[#allocation6 + $0x1cc] sm:$0xf]
    %v742 = vld [vmem:[#allocation6 + $0x1d0] sm:$0xf]
    %v743 = vld [vmem:[#allocation6 + $0x1d4] sm:$0xf]
    %v744 = vld [vmem:[#allocation6 + $0x1d8] sm:$0xf]
    %v745 = vld [vmem:[#allocation6 + $0x1dc] sm:$0xf]
    %v746 = vld [vmem:[#allocation6 + $0x1e0] sm:$0xf]
    %v747 = vld [vmem:[#allocation6 + $0x1e4] sm:$0xf]
    %v748 = vld [vmem:[#allocation6 + $0x1e8] sm:$0xf]
    %v749 = vld [vmem:[#allocation6 + $0x1ec] sm:$0xf]
    %v750 = vld [vmem:[#allocation6 + $0x1f0] sm:$0xf]
    %v751 = vld [vmem:[#allocation6 + $0x1f4] sm:$0xf]
    %v752 = vld [vmem:[#allocation6 + $0x1f8] sm:$0xf]
    %v753 = vld [vmem:[#allocation6 + $0x1fc] sm:$0xf]
    %v754 = vld [vmem:[#allocation6 + $0x200] sm:$0xf]
    %v755 = vld [vmem:[#allocation6 + $0x204] sm:$0xf]
    %v756 = vld [vmem:[#allocation6 + $0x208] sm:$0xf]
    %v757 = vld [vmem:[#allocation6 + $0x20c] sm:$0xf]
    %v758 = vld [vmem:[#allocation6 + $0x210] sm:$0xf]
    %v759 = vld [vmem:[#allocation6 + $0x214] sm:$0xf]
    %v760 = vld [vmem:[#allocation6 + $0x218] sm:$0xf]
    %v761 = vld [vmem:[#allocation6 + $0x21c] sm:$0xf]
    %v762 = vld [vmem:[#allocation6 + $0x220] sm:$0xf]
    %v763 = vld [vmem:[#allocation6 + $0x224] sm:$0xf]
    %v764 = vld [vmem:[#allocation6 + $0x228] sm:$0xf]
    %v765 = vld [vmem:[#allocation6 + $0x22c] sm:$0xf]
    %v766 = vld [vmem:[#allocation6 + $0x230] sm:$0xf]
    %v767 = vld [vmem:[#allocation6 + $0x234] sm:$0xf]
    %v768 = vld [vmem:[#allocation6 + $0x238] sm:$0xf]
    %v769 = vld [vmem:[#allocation6 + $0x23c] sm:$0xf]
    %v914 = vunpack.c.l.b16 %v353
    %v915 = vunpack.c.l.b16 %v385
    %v916 = vunpack.c.l.b16 %v417
    %v917 = vunpack.c.l.b16 %v449
    %v918 = vunpack.c.l.b16 %v481
    %v919 = vunpack.c.l.b16 %v513
    %v920 = vunpack.c.l.b16 %v546
    %v921 = vunpack.c.l.b16 %v578
    %v922 = vunpack.c.l.b16 %v610
    %v923 = vunpack.c.l.b16 %v354
    %v924 = vunpack.c.l.b16 %v386
    %v925 = vunpack.c.l.b16 %v418
    %v926 = vunpack.c.l.b16 %v450
    %v927 = vunpack.c.l.b16 %v482
    %v928 = vunpack.c.l.b16 %v514
    %v929 = vunpack.c.l.b16 %v547
    %v930 = vunpack.c.l.b16 %v579
    %v931 = vunpack.c.l.b16 %v611
    %v932 = vunpack.c.l.b16 %v355
    %v933 = vunpack.c.l.b16 %v387
    %v934 = vunpack.c.l.b16 %v419
    %v935 = vunpack.c.l.b16 %v451
    %v936 = vunpack.c.l.b16 %v483
    %v937 = vunpack.c.l.b16 %v515
    %v938 = vunpack.c.l.b16 %v548
    %v939 = vunpack.c.l.b16 %v580
    %v940 = vunpack.c.l.b16 %v612
    %v941 = vunpack.c.l.b16 %v356
    %v942 = vunpack.c.l.b16 %v388
    %v943 = vunpack.c.l.b16 %v420
    %v944 = vunpack.c.l.b16 %v452
    %v945 = vunpack.c.l.b16 %v484
    %v946 = vunpack.c.l.b16 %v516
    %v947 = vunpack.c.l.b16 %v549
    %v948 = vunpack.c.l.b16 %v581
    %v949 = vunpack.c.l.b16 %v613
    %v950 = vunpack.c.l.b16 %v357
    %v951 = vunpack.c.l.b16 %v389
    %v952 = vunpack.c.l.b16 %v421
    %v953 = vunpack.c.l.b16 %v453
    %v954 = vunpack.c.l.b16 %v485
    %v955 = vunpack.c.l.b16 %v517
    %v956 = vunpack.c.l.b16 %v550
    %v957 = vunpack.c.l.b16 %v582
    %v958 = vunpack.c.l.b16 %v614
    %v959 = vunpack.c.l.b16 %v358
    %v960 = vunpack.c.l.b16 %v390
    %v961 = vunpack.c.l.b16 %v422
    %v962 = vunpack.c.l.b16 %v454
    %v963 = vunpack.c.l.b16 %v486
    %v964 = vunpack.c.l.b16 %v518
    %v965 = vunpack.c.l.b16 %v551
    %v966 = vunpack.c.l.b16 %v583
    %v967 = vunpack.c.l.b16 %v615
    %v968 = vunpack.c.l.b16 %v359
    %v969 = vunpack.c.l.b16 %v391
    %v970 = vunpack.c.l.b16 %v423
    %v971 = vunpack.c.l.b16 %v455
    %v972 = vunpack.c.l.b16 %v487
    %v973 = vunpack.c.l.b16 %v519
    %v974 = vunpack.c.l.b16 %v552
    %v975 = vunpack.c.l.b16 %v584
    %v976 = vunpack.c.l.b16 %v616
    %v977 = vunpack.c.l.b16 %v360
    %v978 = vunpack.c.l.b16 %v392
    %v979 = vunpack.c.l.b16 %v424
    %v980 = vunpack.c.l.b16 %v456
    %v981 = vunpack.c.l.b16 %v488
    %v982 = vunpack.c.l.b16 %v520
    %v983 = vunpack.c.l.b16 %v553
    %v984 = vunpack.c.l.b16 %v585
    %v985 = vunpack.c.l.b16 %v617
    %v986 = vunpack.c.l.b16 %v361
    %v987 = vunpack.c.l.b16 %v393
    %v988 = vunpack.c.l.b16 %v425
    %v989 = vunpack.c.l.b16 %v457
    %v990 = vunpack.c.l.b16 %v489
    %v991 = vunpack.c.l.b16 %v521
    %v992 = vunpack.c.l.b16 %v554
    %v993 = vunpack.c.l.b16 %v586
    %v994 = vunpack.c.l.b16 %v618
    %v995 = vunpack.c.l.b16 %v362
    %v996 = vunpack.c.l.b16 %v394
    %v997 = vunpack.c.l.b16 %v426
    %v998 = vunpack.c.l.b16 %v458
    %v999 = vunpack.c.l.b16 %v490
    %v1000 = vunpack.c.l.b16 %v522
    %v1001 = vunpack.c.l.b16 %v555
    %v1002 = vunpack.c.l.b16 %v587
    %v1003 = vunpack.c.l.b16 %v619
    %v1004 = vunpack.c.l.b16 %v363
    %v1005 = vunpack.c.l.b16 %v395
    %v1006 = vunpack.c.l.b16 %v427
    %v1007 = vunpack.c.l.b16 %v459
    %v1008 = vunpack.c.l.b16 %v491
    %v1009 = vunpack.c.l.b16 %v523
    %v1010 = vunpack.c.l.b16 %v556
    %v1011 = vunpack.c.l.b16 %v588
    %v1012 = vunpack.c.l.b16 %v620
    %v1013 = vunpack.c.l.b16 %v364
    %v1014 = vunpack.c.l.b16 %v396
    %v1015 = vunpack.c.l.b16 %v428
    %v1016 = vunpack.c.l.b16 %v460
    %v1017 = vunpack.c.l.b16 %v492
    %v1018 = vunpack.c.l.b16 %v524
    %v1019 = vunpack.c.l.b16 %v557
    %v1020 = vunpack.c.l.b16 %v589
    %v1021 = vunpack.c.l.b16 %v621
    %v1022 = vunpack.c.l.b16 %v365
    %v1023 = vunpack.c.l.b16 %v397
    %v1024 = vunpack.c.l.b16 %v429
    %v1025 = vunpack.c.l.b16 %v461
    %v1026 = vunpack.c.l.b16 %v493
    %v1027 = vunpack.c.l.b16 %v525
    %v1028 = vunpack.c.l.b16 %v558
    %v1029 = vunpack.c.l.b16 %v590
    %v1030 = vunpack.c.l.b16 %v622
    %v1031 = vunpack.c.l.b16 %v366
    %v1032 = vunpack.c.l.b16 %v398
    %v1033 = vunpack.c.l.b16 %v430
    %v1034 = vunpack.c.l.b16 %v462
    %v1035 = vunpack.c.l.b16 %v494
    %v1036 = vunpack.c.l.b16 %v526
    %v1037 = vunpack.c.l.b16 %v559
    %v1038 = vunpack.c.l.b16 %v591
    %v1039 = vunpack.c.l.b16 %v623
    %v1040 = vunpack.c.l.b16 %v367
    %v1041 = vunpack.c.l.b16 %v399
    %v1042 = vunpack.c.l.b16 %v431
    %v1043 = vunpack.c.l.b16 %v463
    %v1044 = vunpack.c.l.b16 %v495
    %v1045 = vunpack.c.l.b16 %v527
    %v1046 = vunpack.c.l.b16 %v560
    %v1047 = vunpack.c.l.b16 %v592
    %v1048 = vunpack.c.l.b16 %v624
    %v1049 = vunpack.c.l.b16 %v368
    %v1050 = vunpack.c.l.b16 %v400
    %v1051 = vunpack.c.l.b16 %v432
    %v1052 = vunpack.c.l.b16 %v464
    %v1053 = vunpack.c.l.b16 %v496
    %v1054 = vunpack.c.l.b16 %v528
    %v1055 = vunpack.c.l.b16 %v561
    %v1056 = vunpack.c.l.b16 %v593
    %v1057 = vunpack.c.l.b16 %v625
    %v1058 = vpack.c.b16 %v923, %v914
    %v1059 = vpack.c.b16 %v924, %v915
    %v1060 = vpack.c.b16 %v925, %v916
    %v1061 = vpack.c.b16 %v926, %v917
    %v1062 = vpack.c.b16 %v927, %v918
    %v1063 = vpack.c.b16 %v928, %v919
    %v1064 = vpack.c.b16 %v929, %v920
    %v1065 = vpack.c.b16 %v930, %v921
    %v1066 = vpack.c.b16 %v931, %v922
    %v1067 = vpack.c.b16 %v941, %v932
    %v1068 = vpack.c.b16 %v942, %v933
    %v1069 = vpack.c.b16 %v943, %v934
    %v1070 = vpack.c.b16 %v944, %v935
    %v1071 = vpack.c.b16 %v945, %v936
    %v1072 = vpack.c.b16 %v946, %v937
    %v1073 = vpack.c.b16 %v947, %v938
    %v1074 = vpack.c.b16 %v948, %v939
    %v1075 = vpack.c.b16 %v949, %v940
    %v1076 = vpack.c.b16 %v959, %v950
    %v1077 = vpack.c.b16 %v960, %v951
    %v1078 = vpack.c.b16 %v961, %v952
    %v1079 = vpack.c.b16 %v962, %v953
    %v1080 = vpack.c.b16 %v963, %v954
    %v1081 = vpack.c.b16 %v964, %v955
    %v1082 = vpack.c.b16 %v965, %v956
    %v1083 = vpack.c.b16 %v966, %v957
    %v1084 = vpack.c.b16 %v967, %v958
    %v1085 = vpack.c.b16 %v977, %v968
    %v1086 = vpack.c.b16 %v978, %v969
    %v1087 = vpack.c.b16 %v979, %v970
    %v1088 = vpack.c.b16 %v980, %v971
    %v1089 = vpack.c.b16 %v981, %v972
    %v1090 = vpack.c.b16 %v982, %v973
    %v1091 = vpack.c.b16 %v983, %v974
    %v1092 = vpack.c.b16 %v984, %v975
    %v1093 = vpack.c.b16 %v985, %v976
    %v1094 = vpack.c.b16 %v995, %v986
    %v1095 = vpack.c.b16 %v996, %v987
    %v1096 = vpack.c.b16 %v997, %v988
    %v1097 = vpack.c.b16 %v998, %v989
    %v1098 = vpack.c.b16 %v999, %v990
    %v1099 = vpack.c.b16 %v1000, %v991
    %v1100 = vpack.c.b16 %v1001, %v992
    %v1101 = vpack.c.b16 %v1002, %v993
    %v1102 = vpack.c.b16 %v1003, %v994
    %v1103 = vpack.c.b16 %v1013, %v1004
    %v1104 = vpack.c.b16 %v1014, %v1005
    %v1105 = vpack.c.b16 %v1015, %v1006
    %v1106 = vpack.c.b16 %v1016, %v1007
    %v1107 = vpack.c.b16 %v1017, %v1008
    %v1108 = vpack.c.b16 %v1018, %v1009
    %v1109 = vpack.c.b16 %v1019, %v1010
    %v1110 = vpack.c.b16 %v1020, %v1011
    %v1111 = vpack.c.b16 %v1021, %v1012
    %v1112 = vpack.c.b16 %v1031, %v1022
    %v1113 = vpack.c.b16 %v1032, %v1023
    %v1114 = vpack.c.b16 %v1033, %v1024
    %v1115 = vpack.c.b16 %v1034, %v1025
    %v1116 = vpack.c.b16 %v1035, %v1026
    %v1117 = vpack.c.b16 %v1036, %v1027
    %v1118 = vpack.c.b16 %v1037, %v1028
    %v1119 = vpack.c.b16 %v1038, %v1029
    %v1120 = vpack.c.b16 %v1039, %v1030
    %v1121 = vpack.c.b16 %v1049, %v1040
    %v1122 = vpack.c.b16 %v1050, %v1041
    %v1123 = vpack.c.b16 %v1051, %v1042
    %v1124 = vpack.c.b16 %v1052, %v1043
    %v1125 = vpack.c.b16 %v1053, %v1044
    %v1126 = vpack.c.b16 %v1054, %v1045
    %v1127 = vpack.c.b16 %v1055, %v1046
    %v1128 = vpack.c.b16 %v1056, %v1047
    %v1129 = vpack.c.b16 %v1057, %v1048
    %v1346 = vunpack.c.l.b16 %v626
    %v1347 = vunpack.c.l.b16 %v627
    %v1348 = vunpack.c.l.b16 %v628
    %v1349 = vunpack.c.l.b16 %v629
    %v1350 = vunpack.c.l.b16 %v630
    %v1351 = vunpack.c.l.b16 %v631
    %v1352 = vunpack.c.l.b16 %v632
    %v1353 = vunpack.c.l.b16 %v633
    %v1354 = vunpack.c.l.b16 %v634
    %v1355 = vunpack.c.l.b16 %v635
    %v1356 = vunpack.c.l.b16 %v636
    %v1357 = vunpack.c.l.b16 %v637
    %v1358 = vunpack.c.l.b16 %v638
    %v1359 = vunpack.c.l.b16 %v639
    %v1360 = vunpack.c.l.b16 %v640
    %v1361 = vunpack.c.l.b16 %v641
    %v1362 = vunpack.c.l.b16 %v642
    %v1363 = vunpack.c.l.b16 %v643
    %v1364 = vunpack.c.l.b16 %v644
    %v1365 = vunpack.c.l.b16 %v645
    %v1366 = vunpack.c.l.b16 %v646
    %v1367 = vunpack.c.l.b16 %v647
    %v1368 = vunpack.c.l.b16 %v648
    %v1369 = vunpack.c.l.b16 %v649
    %v1370 = vunpack.c.l.b16 %v650
    %v1371 = vunpack.c.l.b16 %v651
    %v1372 = vunpack.c.l.b16 %v652
    %v1373 = vunpack.c.l.b16 %v653
    %v1374 = vunpack.c.l.b16 %v654
    %v1375 = vunpack.c.l.b16 %v655
    %v1376 = vunpack.c.l.b16 %v656
    %v1377 = vunpack.c.l.b16 %v657
    %v1378 = vunpack.c.l.b16 %v658
    %v1379 = vunpack.c.l.b16 %v659
    %v1380 = vunpack.c.l.b16 %v660
    %v1381 = vunpack.c.l.b16 %v661
    %v1382 = vunpack.c.l.b16 %v662
    %v1383 = vunpack.c.l.b16 %v663
    %v1384 = vunpack.c.l.b16 %v664
    %v1385 = vunpack.c.l.b16 %v665
    %v1386 = vunpack.c.l.b16 %v666
    %v1387 = vunpack.c.l.b16 %v667
    %v1388 = vunpack.c.l.b16 %v668
    %v1389 = vunpack.c.l.b16 %v669
    %v1390 = vunpack.c.l.b16 %v670
    %v1391 = vunpack.c.l.b16 %v671
    %v1392 = vunpack.c.l.b16 %v672
    %v1393 = vunpack.c.l.b16 %v673
    %v1394 = vunpack.c.l.b16 %v674
    %v1395 = vunpack.c.l.b16 %v675
    %v1396 = vunpack.c.l.b16 %v676
    %v1397 = vunpack.c.l.b16 %v677
    %v1398 = vunpack.c.l.b16 %v678
    %v1399 = vunpack.c.l.b16 %v679
    %v1400 = vunpack.c.l.b16 %v680
    %v1401 = vunpack.c.l.b16 %v681
    %v1402 = vunpack.c.l.b16 %v682
    %v1403 = vunpack.c.l.b16 %v683
    %v1404 = vunpack.c.l.b16 %v684
    %v1405 = vunpack.c.l.b16 %v685
    %v1406 = vunpack.c.l.b16 %v686
    %v1407 = vunpack.c.l.b16 %v687
    %v1408 = vunpack.c.l.b16 %v688
    %v1409 = vunpack.c.l.b16 %v689
    %v1410 = vunpack.c.l.b16 %v690
    %v1411 = vunpack.c.l.b16 %v691
    %v1412 = vunpack.c.l.b16 %v692
    %v1413 = vunpack.c.l.b16 %v693
    %v1414 = vunpack.c.l.b16 %v694
    %v1415 = vunpack.c.l.b16 %v695
    %v1416 = vunpack.c.l.b16 %v696
    %v1417 = vunpack.c.l.b16 %v697
    %v1418 = vunpack.c.l.b16 %v698
    %v1419 = vunpack.c.l.b16 %v699
    %v1420 = vunpack.c.l.b16 %v700
    %v1421 = vunpack.c.l.b16 %v701
    %v1422 = vunpack.c.l.b16 %v702
    %v1423 = vunpack.c.l.b16 %v703
    %v1424 = vunpack.c.l.b16 %v704
    %v1425 = vunpack.c.l.b16 %v705
    %v1426 = vunpack.c.l.b16 %v706
    %v1427 = vunpack.c.l.b16 %v707
    %v1428 = vunpack.c.l.b16 %v708
    %v1429 = vunpack.c.l.b16 %v709
    %v1430 = vunpack.c.l.b16 %v710
    %v1431 = vunpack.c.l.b16 %v711
    %v1432 = vunpack.c.l.b16 %v712
    %v1433 = vunpack.c.l.b16 %v713
    %v1434 = vunpack.c.l.b16 %v714
    %v1435 = vunpack.c.l.b16 %v715
    %v1436 = vunpack.c.l.b16 %v716
    %v1437 = vunpack.c.l.b16 %v717
    %v1438 = vunpack.c.l.b16 %v718
    %v1439 = vunpack.c.l.b16 %v719
    %v1440 = vunpack.c.l.b16 %v720
    %v1441 = vunpack.c.l.b16 %v721
    %v1442 = vunpack.c.l.b16 %v722
    %v1443 = vunpack.c.l.b16 %v723
    %v1444 = vunpack.c.l.b16 %v724
    %v1445 = vunpack.c.l.b16 %v725
    %v1446 = vunpack.c.l.b16 %v726
    %v1447 = vunpack.c.l.b16 %v727
    %v1448 = vunpack.c.l.b16 %v728
    %v1449 = vunpack.c.l.b16 %v729
    %v1450 = vunpack.c.l.b16 %v730
    %v1451 = vunpack.c.l.b16 %v731
    %v1452 = vunpack.c.l.b16 %v732
    %v1453 = vunpack.c.l.b16 %v733
    %v1454 = vunpack.c.l.b16 %v734
    %v1455 = vunpack.c.l.b16 %v735
    %v1456 = vunpack.c.l.b16 %v736
    %v1457 = vunpack.c.l.b16 %v737
    %v1458 = vunpack.c.l.b16 %v738
    %v1459 = vunpack.c.l.b16 %v739
    %v1460 = vunpack.c.l.b16 %v740
    %v1461 = vunpack.c.l.b16 %v741
    %v1462 = vunpack.c.l.b16 %v742
    %v1463 = vunpack.c.l.b16 %v743
    %v1464 = vunpack.c.l.b16 %v744
    %v1465 = vunpack.c.l.b16 %v745
    %v1466 = vunpack.c.l.b16 %v746
    %v1467 = vunpack.c.l.b16 %v747
    %v1468 = vunpack.c.l.b16 %v748
    %v1469 = vunpack.c.l.b16 %v749
    %v1470 = vunpack.c.l.b16 %v750
    %v1471 = vunpack.c.l.b16 %v751
    %v1472 = vunpack.c.l.b16 %v752
    %v1473 = vunpack.c.l.b16 %v753
    %v1474 = vunpack.c.l.b16 %v754
    %v1475 = vunpack.c.l.b16 %v755
    %v1476 = vunpack.c.l.b16 %v756
    %v1477 = vunpack.c.l.b16 %v757
    %v1478 = vunpack.c.l.b16 %v758
    %v1479 = vunpack.c.l.b16 %v759
    %v1480 = vunpack.c.l.b16 %v760
    %v1481 = vunpack.c.l.b16 %v761
    %v1482 = vunpack.c.l.b16 %v762
    %v1483 = vunpack.c.l.b16 %v763
    %v1484 = vunpack.c.l.b16 %v764
    %v1485 = vunpack.c.l.b16 %v765
    %v1486 = vunpack.c.l.b16 %v766
    %v1487 = vunpack.c.l.b16 %v767
    %v1488 = vunpack.c.l.b16 %v768
    %v1489 = vunpack.c.l.b16 %v769
    %v1490 = vpack.c.b16 %v1347, %v1346
    %v1491 = vpack.c.b16 %v1349, %v1348
    %v1492 = vpack.c.b16 %v1351, %v1350
    %v1493 = vpack.c.b16 %v1353, %v1352
    %v1494 = vpack.c.b16 %v1355, %v1354
    %v1495 = vpack.c.b16 %v1357, %v1356
    %v1496 = vpack.c.b16 %v1359, %v1358
    %v1497 = vpack.c.b16 %v1361, %v1360
    %v1498 = vpack.c.b16 %v1363, %v1362
    %v1499 = vpack.c.b16 %v1365, %v1364
    %v1500 = vpack.c.b16 %v1367, %v1366
    %v1501 = vpack.c.b16 %v1369, %v1368
    %v1502 = vpack.c.b16 %v1371, %v1370
    %v1503 = vpack.c.b16 %v1373, %v1372
    %v1504 = vpack.c.b16 %v1375, %v1374
    %v1505 = vpack.c.b16 %v1377, %v1376
    %v1506 = vpack.c.b16 %v1379, %v1378
    %v1507 = vpack.c.b16 %v1381, %v1380
    %v1508 = vpack.c.b16 %v1383, %v1382
    %v1509 = vpack.c.b16 %v1385, %v1384
    %v1510 = vpack.c.b16 %v1387, %v1386
    %v1511 = vpack.c.b16 %v1389, %v1388
    %v1512 = vpack.c.b16 %v1391, %v1390
    %v1513 = vpack.c.b16 %v1393, %v1392
    %v1514 = vpack.c.b16 %v1395, %v1394
    %v1515 = vpack.c.b16 %v1397, %v1396
    %v1516 = vpack.c.b16 %v1399, %v1398
    %v1517 = vpack.c.b16 %v1401, %v1400
    %v1518 = vpack.c.b16 %v1403, %v1402
    %v1519 = vpack.c.b16 %v1405, %v1404
    %v1520 = vpack.c.b16 %v1407, %v1406
    %v1521 = vpack.c.b16 %v1409, %v1408
    %v1522 = vpack.c.b16 %v1411, %v1410
    %v1523 = vpack.c.b16 %v1413, %v1412
    %v1524 = vpack.c.b16 %v1415, %v1414
    %v1525 = vpack.c.b16 %v1417, %v1416
    %v1526 = vpack.c.b16 %v1419, %v1418
    %v1527 = vpack.c.b16 %v1421, %v1420
    %v1528 = vpack.c.b16 %v1423, %v1422
    %v1529 = vpack.c.b16 %v1425, %v1424
    %v1530 = vpack.c.b16 %v1427, %v1426
    %v1531 = vpack.c.b16 %v1429, %v1428
    %v1532 = vpack.c.b16 %v1431, %v1430
    %v1533 = vpack.c.b16 %v1433, %v1432
    %v1534 = vpack.c.b16 %v1435, %v1434
    %v1535 = vpack.c.b16 %v1437, %v1436
    %v1536 = vpack.c.b16 %v1439, %v1438
    %v1537 = vpack.c.b16 %v1441, %v1440
    %v1538 = vpack.c.b16 %v1443, %v1442
    %v1539 = vpack.c.b16 %v1445, %v1444
    %v1540 = vpack.c.b16 %v1447, %v1446
    %v1541 = vpack.c.b16 %v1449, %v1448
    %v1542 = vpack.c.b16 %v1451, %v1450
    %v1543 = vpack.c.b16 %v1453, %v1452
    %v1544 = vpack.c.b16 %v1455, %v1454
    %v1545 = vpack.c.b16 %v1457, %v1456
    %v1546 = vpack.c.b16 %v1459, %v1458
    %v1547 = vpack.c.b16 %v1461, %v1460
    %v1548 = vpack.c.b16 %v1463, %v1462
    %v1549 = vpack.c.b16 %v1465, %v1464
    %v1550 = vpack.c.b16 %v1467, %v1466
    %v1551 = vpack.c.b16 %v1469, %v1468
    %v1552 = vpack.c.b16 %v1471, %v1470
    %v1553 = vpack.c.b16 %v1473, %v1472
    %v1554 = vpack.c.b16 %v1475, %v1474
    %v1555 = vpack.c.b16 %v1477, %v1476
    %v1556 = vpack.c.b16 %v1479, %v1478
    %v1557 = vpack.c.b16 %v1481, %v1480
    %v1558 = vpack.c.b16 %v1483, %v1482
    %v1559 = vpack.c.b16 %v1485, %v1484
    %v1560 = vpack.c.b16 %v1487, %v1486
    %v1561 = vpack.c.b16 %v1489, %v1488
    %1634 = vmatprep.subr.bf16.mxu0 0
    %1635 = vmatpush1.bf16.msra.mxu0 %v1490
    %1636 = vmatprep.subr.bf16.mxu0 0
    %1637 = vmatpush1.bf16.msra.mxu0 %v1491
    %1638 = vmatprep.subr.bf16.mxu0 0
    %1639 = vmatpush1.bf16.msra.mxu0 %v1492
    %1640 = vmatprep.subr.bf16.mxu0 0
    %1641 = vmatpush1.bf16.msra.mxu0 %v1493
    %1642 = vmatprep.subr.bf16.mxu0 0
    %1643 = vmatpush1.bf16.msra.mxu0 %v1494
    %1644 = vmatprep.subr.bf16.mxu0 0
    %1645 = vmatpush1.bf16.msra.mxu0 %v1495
    %1646 = vmatprep.subr.bf16.mxu0 0
    %1647 = vmatpush1.bf16.msra.mxu0 %v1496
    %1648 = vmatprep.subr.bf16.mxu0 0
    %1649 = vmatpush1.bf16.msra.mxu0 %v1497
    %1650 = vmatprep.subr.bf16.mxu0 0
    %1651 = vmatpush1.bf16.msra.mxu0 %v1498
    %1652 = vmatprep.subr.bf16.mxu0 0
    %1653 = vmatpush1.bf16.msra.mxu0 %v1499
    %1654 = vmatprep.subr.bf16.mxu0 0
    %1655 = vmatpush1.bf16.msra.mxu0 %v1500
    %1656 = vmatprep.subr.bf16.mxu0 0
    %1657 = vmatpush1.bf16.msra.mxu0 %v1501
    %1658 = vmatprep.subr.bf16.mxu0 0
    %1659 = vmatpush1.bf16.msra.mxu0 %v1502
    %1660 = vmatprep.subr.bf16.mxu0 0
    %1661 = vmatpush1.bf16.msra.mxu0 %v1503
    %1662 = vmatprep.subr.bf16.mxu0 0
    %1663 = vmatpush1.bf16.msra.mxu0 %v1504
    %1664 = vmatprep.subr.bf16.mxu0 0
    %1665 = vmatpush1.bf16.msra.mxu0 %v1505
    %1666 = vmatprep.mubr.bf16.mxu0 %v1059
    %1667 = vmatmul.mubr.bf16.gmra.mrb[0].mxu0 %v1058
    %v1668 = vpop.f32.mrb[0].mxu0
    %v1669 = vadd.f32 0.0, %v1668
    %v1670 = vpop.f32.mrb[0].mxu0
    %v1671 = vpop.f32.mrb[0].mxu0
    %v1672 = vadd.f32 0.0, %v1671
    %v1673 = vpop.f32.mrb[0].mxu0
    %1674 = vmatprep.mubr.bf16.mxu0 %v1068
    %1675 = vmatmul.mubr.bf16.gmra.mrb[0].mxu0 %v1067
    %v1676 = vpop.f32.mrb[0].mxu0
    %v1677 = vadd.f32 0.0, %v1676
    %v1678 = vpop.f32.mrb[0].mxu0
    %v1679 = vpop.f32.mrb[0].mxu0
    %v1680 = vadd.f32 0.0, %v1679
    %v1681 = vpop.f32.mrb[0].mxu0
    %1682 = vmatprep.mubr.bf16.mxu0 %v1077
    %1683 = vmatmul.mubr.bf16.gmra.mrb[0].mxu0 %v1076
    %v1684 = vpop.f32.mrb[0].mxu0
    %v1685 = vadd.f32 0.0, %v1684
    %v1686 = vpop.f32.mrb[0].mxu0
    %v1687 = vpop.f32.mrb[0].mxu0
    %v1688 = vadd.f32 0.0, %v1687
    %v1689 = vpop.f32.mrb[0].mxu0
    %1690 = vmatprep.mubr.bf16.mxu0 %v1086
    %1691 = vmatmul.mubr.bf16.gmra.mrb[0].mxu0 %v1085
    %v1692 = vpop.f32.mrb[0].mxu0
    %v1693 = vadd.f32 0.0, %v1692
    %v1694 = vpop.f32.mrb[0].mxu0
    %v1695 = vpop.f32.mrb[0].mxu0
    %v1696 = vadd.f32 0.0, %v1695
    %v1697 = vpop.f32.mrb[0].mxu0
    %1698 = vmatprep.mubr.bf16.mxu0 %v1095
    %1699 = vmatmul.mubr.bf16.gmra.mrb[0].mxu0 %v1094
    %v1700 = vpop.f32.mrb[0].mxu0
    %v1701 = vadd.f32 0.0, %v1700
    %v1702 = vpop.f32.mrb[0].mxu0
    %v1703 = vpop.f32.mrb[0].mxu0
    %v1704 = vadd.f32 0.0, %v1703
    %v1705 = vpop.f32.mrb[0].mxu0
    %1706 = vmatprep.mubr.bf16.mxu0 %v1104
    %1707 = vmatmul.mubr.bf16.gmra.mrb[0].mxu0 %v1103
    %v1708 = vpop.f32.mrb[0].mxu0
    %v1709 = vadd.f32 0.0, %v1708
    %v1710 = vpop.f32.mrb[0].mxu0
    %v1711 = vpop.f32.mrb[0].mxu0
    %v1712 = vadd.f32 0.0, %v1711
    %v1713 = vpop.f32.mrb[0].mxu0
    %1714 = vmatprep.mubr.bf16.mxu0 %v1113
    %1715 = vmatmul.mubr.bf16.gmra.mrb[0].mxu0 %v1112
    %v1716 = vpop.f32.mrb[0].mxu0
    %v1717 = vadd.f32 0.0, %v1716
    %v1718 = vpop.f32.mrb[0].mxu0
    %v1719 = vpop.f32.mrb[0].mxu0
    %v1720 = vadd.f32 0.0, %v1719
    %v1721 = vpop.f32.mrb[0].mxu0
    %1722 = vmatprep.mubr.bf16.mxu0 %v1122
    %1723 = vmatmul.mubr.bf16.gmra.mrb[0].mxu0 %v1121
    %v1724 = vpop.f32.mrb[0].mxu0
    %v1725 = vadd.f32 0.0, %v1724
    %v1726 = vpop.f32.mrb[0].mxu0
    %v1727 = vpop.f32.mrb[0].mxu0
    %v1728 = vadd.f32 0.0, %v1727
    %v1729 = vpop.f32.mrb[0].mxu0
    %1730 = vdwg.mxu0
    %1731 = vmatprep.subr.bf16.mxu0 0
    %1732 = vmatpush1.bf16.msra.mxu0 %v1506
    %1733 = vmatprep.subr.bf16.mxu0 0
    %1734 = vmatpush1.bf16.msra.mxu0 %v1507
    %1735 = vmatprep.subr.bf16.mxu0 0
    %1736 = vmatpush1.bf16.msra.mxu0 %v1508
    %1737 = vmatprep.subr.bf16.mxu0 0
    %1738 = vmatpush1.bf16.msra.mxu0 %v1509
    %1739 = vmatprep.subr.bf16.mxu0 0
    %1740 = vmatpush1.bf16.msra.mxu0 %v1510
    %1741 = vmatprep.subr.bf16.mxu0 0
    %1742 = vmatpush1.bf16.msra.mxu0 %v1511
    %1743 = vmatprep.subr.bf16.mxu0 0
    %1744 = vmatpush1.bf16.msra.mxu0 %v1512
    %1745 = vmatprep.subr.bf16.mxu0 0
    %1746 = vmatpush1.bf16.msra.mxu0 %v1513
    %1747 = vmatprep.subr.bf16.mxu0 0
    %1748 = vmatpush1.bf16.msra.mxu0 %v1514
    %1749 = vmatprep.subr.bf16.mxu0 0
    %1750 = vmatpush1.bf16.msra.mxu0 %v1515
    %1751 = vmatprep.subr.bf16.mxu0 0
    %1752 = vmatpush1.bf16.msra.mxu0 %v1516
    %1753 = vmatprep.subr.bf16.mxu0 0
    %1754 = vmatpush1.bf16.msra.mxu0 %v1517
    %1755 = vmatprep.subr.bf16.mxu0 0
    %1756 = vmatpush1.bf16.msra.mxu0 %v1518
    %1757 = vmatprep.subr.bf16.mxu0 0
    %1758 = vmatpush1.bf16.msra.mxu0 %v1519
    %1759 = vmatprep.subr.bf16.mxu0 0
    %1760 = vmatpush1.bf16.msra.mxu0 %v1520
    %1761 = vmatprep.subr.bf16.mxu0 0
    %1762 = vmatpush1.bf16.msra.mxu0 %v1521
    %1763 = vmatprep.mubr.bf16.mxu0 %v1061
    %1764 = vmatmul.mubr.bf16.gmra.mrb[0].mxu0 %v1060
    %v1765 = vpop.f32.mrb[0].mxu0
    %v1766 = vadd.f32 %v1669, %v1765
    %v1767 = vpop.f32.mrb[0].mxu0
    %v1768 = vpop.f32.mrb[0].mxu0
    %v1769 = vadd.f32 %v1672, %v1768
    %v1770 = vpop.f32.mrb[0].mxu0
    %1771 = vmatprep.mubr.bf16.mxu0 %v1070
    %1772 = vmatmul.mubr.bf16.gmra.mrb[0].mxu0 %v1069
    %v1773 = vpop.f32.mrb[0].mxu0
    %v1774 = vadd.f32 %v1677, %v1773
    %v1775 = vpop.f32.mrb[0].mxu0
    %v1776 = vpop.f32.mrb[0].mxu0
    %v1777 = vadd.f32 %v1680, %v1776
    %v1778 = vpop.f32.mrb[0].mxu0
    %1779 = vmatprep.mubr.bf16.mxu0 %v1079
    %1780 = vmatmul.mubr.bf16.gmra.mrb[0].mxu0 %v1078
    %v1781 = vpop.f32.mrb[0].mxu0
    %v1782 = vadd.f32 %v1685, %v1781
    %v1783 = vpop.f32.mrb[0].mxu0
    %v1784 = vpop.f32.mrb[0].mxu0
    %v1785 = vadd.f32 %v1688, %v1784
    %v1786 = vpop.f32.mrb[0].mxu0
    %1787 = vmatprep.mubr.bf16.mxu0 %v1088
    %1788 = vmatmul.mubr.bf16.gmra.mrb[0].mxu0 %v1087
    %v1789 = vpop.f32.mrb[0].mxu0
    %v1790 = vadd.f32 %v1693, %v1789
    %v1791 = vpop.f32.mrb[0].mxu0
    %v1792 = vpop.f32.mrb[0].mxu0
    %v1793 = vadd.f32 %v1696, %v1792
    %v1794 = vpop.f32.mrb[0].mxu0
    %1795 = vmatprep.mubr.bf16.mxu0 %v1097
    %1796 = vmatmul.mubr.bf16.gmra.mrb[0].mxu0 %v1096
    %v1797 = vpop.f32.mrb[0].mxu0
    %v1798 = vadd.f32 %v1701, %v1797
    %v1799 = vpop.f32.mrb[0].mxu0
    %v1800 = vpop.f32.mrb[0].mxu0
    %v1801 = vadd.f32 %v1704, %v1800
    %v1802 = vpop.f32.mrb[0].mxu0
    %1803 = vmatprep.mubr.bf16.mxu0 %v1106
    %1804 = vmatmul.mubr.bf16.gmra.mrb[0].mxu0 %v1105
    %v1805 = vpop.f32.mrb[0].mxu0
    %v1806 = vadd.f32 %v1709, %v1805
    %v1807 = vpop.f32.mrb[0].mxu0
    %v1808 = vpop.f32.mrb[0].mxu0
    %v1809 = vadd.f32 %v1712, %v1808
    %v1810 = vpop.f32.mrb[0].mxu0
    %1811 = vmatprep.mubr.bf16.mxu0 %v1115
    %1812 = vmatmul.mubr.bf16.gmra.mrb[0].mxu0 %v1114
    %v1813 = vpop.f32.mrb[0].mxu0
    %v1814 = vadd.f32 %v1717, %v1813
    %v1815 = vpop.f32.mrb[0].mxu0
    %v1816 = vpop.f32.mrb[0].mxu0
    %v1817 = vadd.f32 %v1720, %v1816
    %v1818 = vpop.f32.mrb[0].mxu0
    %1819 = vmatprep.mubr.bf16.mxu0 %v1124
    %1820 = vmatmul.mubr.bf16.gmra.mrb[0].mxu0 %v1123
    %v1821 = vpop.f32.mrb[0].mxu0
    %v1822 = vadd.f32 %v1725, %v1821
    %v1823 = vpop.f32.mrb[0].mxu0
    %v1824 = vpop.f32.mrb[0].mxu0
    %v1825 = vadd.f32 %v1728, %v1824
    %v1826 = vpop.f32.mrb[0].mxu0
    %1827 = vdwg.mxu0
    %1828 = vmatprep.subr.bf16.mxu0 0
    %1829 = vmatpush1.bf16.msra.mxu0 %v1522
    %1830 = vmatprep.subr.bf16.mxu0 0
    %1831 = vmatpush1.bf16.msra.mxu0 %v1523
    %1832 = vmatprep.subr.bf16.mxu0 0
    %1833 = vmatpush1.bf16.msra.mxu0 %v1524
    %1834 = vmatprep.subr.bf16.mxu0 0
    %1835 = vmatpush1.bf16.msra.mxu0 %v1525
    %1836 = vmatprep.subr.bf16.mxu0 0
    %1837 = vmatpush1.bf16.msra.mxu0 %v1526
    %1838 = vmatprep.subr.bf16.mxu0 0
    %1839 = vmatpush1.bf16.msra.mxu0 %v1527
    %1840 = vmatprep.subr.bf16.mxu0 0
    %1841 = vmatpush1.bf16.msra.mxu0 %v1528
    %1842 = vmatprep.subr.bf16.mxu0 0
    %1843 = vmatpush1.bf16.msra.mxu0 %v1529
    %1844 = vmatprep.subr.bf16.mxu0 0
    %1845 = vmatpush1.bf16.msra.mxu0 %v1530
    %1846 = vmatprep.subr.bf16.mxu0 0
    %1847 = vmatpush1.bf16.msra.mxu0 %v1531
    %1848 = vmatprep.subr.bf16.mxu0 0
    %1849 = vmatpush1.bf16.msra.mxu0 %v1532
    %1850 = vmatprep.subr.bf16.mxu0 0
    %1851 = vmatpush1.bf16.msra.mxu0 %v1533
    %1852 = vmatprep.subr.bf16.mxu0 0
    %1853 = vmatpush1.bf16.msra.mxu0 %v1534
    %1854 = vmatprep.subr.bf16.mxu0 0
    %1855 = vmatpush1.bf16.msra.mxu0 %v1535
    %1856 = vmatprep.subr.bf16.mxu0 0
    %1857 = vmatpush1.bf16.msra.mxu0 %v1536
    %1858 = vmatprep.subr.bf16.mxu0 0
    %1859 = vmatpush1.bf16.msra.mxu0 %v1537
    %1860 = vmatprep.mubr.bf16.mxu0 %v1063
    %1861 = vmatmul.mubr.bf16.gmra.mrb[0].mxu0 %v1062
    %v1862 = vpop.f32.mrb[0].mxu0
    %v1863 = vadd.f32 %v1766, %v1862
    %v1864 = vpop.f32.mrb[0].mxu0
    %v1865 = vpop.f32.mrb[0].mxu0
    %v1866 = vadd.f32 %v1769, %v1865
    %v1867 = vpop.f32.mrb[0].mxu0
    %1868 = vmatprep.mubr.bf16.mxu0 %v1072
    %1869 = vmatmul.mubr.bf16.gmra.mrb[0].mxu0 %v1071
    %v1870 = vpop.f32.mrb[0].mxu0
    %v1871 = vadd.f32 %v1774, %v1870
    %v1872 = vpop.f32.mrb[0].mxu0
    %v1873 = vpop.f32.mrb[0].mxu0
    %v1874 = vadd.f32 %v1777, %v1873
    %v1875 = vpop.f32.mrb[0].mxu0
    %1876 = vmatprep.mubr.bf16.mxu0 %v1081
    %1877 = vmatmul.mubr.bf16.gmra.mrb[0].mxu0 %v1080
    %v1878 = vpop.f32.mrb[0].mxu0
    %v1879 = vadd.f32 %v1782, %v1878
    %v1880 = vpop.f32.mrb[0].mxu0
    %v1881 = vpop.f32.mrb[0].mxu0
    %v1882 = vadd.f32 %v1785, %v1881
    %v1883 = vpop.f32.mrb[0].mxu0
    %1884 = vmatprep.mubr.bf16.mxu0 %v1090
    %1885 = vmatmul.mubr.bf16.gmra.mrb[0].mxu0 %v1089
    %v1886 = vpop.f32.mrb[0].mxu0
    %v1887 = vadd.f32 %v1790, %v1886
    %v1888 = vpop.f32.mrb[0].mxu0
    %v1889 = vpop.f32.mrb[0].mxu0
    %v1890 = vadd.f32 %v1793, %v1889
    %v1891 = vpop.f32.mrb[0].mxu0
    %1892 = vmatprep.mubr.bf16.mxu0 %v1099
    %1893 = vmatmul.mubr.bf16.gmra.mrb[0].mxu0 %v1098
    %v1894 = vpop.f32.mrb[0].mxu0
    %v1895 = vadd.f32 %v1798, %v1894
    %v1896 = vpop.f32.mrb[0].mxu0
    %v1897 = vpop.f32.mrb[0].mxu0
    %v1898 = vadd.f32 %v1801, %v1897
    %v1899 = vpop.f32.mrb[0].mxu0
    %1900 = vmatprep.mubr.bf16.mxu0 %v1108
    %1901 = vmatmul.mubr.bf16.gmra.mrb[0].mxu0 %v1107
    %v1902 = vpop.f32.mrb[0].mxu0
    %v1903 = vadd.f32 %v1806, %v1902
    %v1904 = vpop.f32.mrb[0].mxu0
    %v1905 = vpop.f32.mrb[0].mxu0
    %v1906 = vadd.f32 %v1809, %v1905
    %v1907 = vpop.f32.mrb[0].mxu0
    %1908 = vmatprep.mubr.bf16.mxu0 %v1117
    %1909 = vmatmul.mubr.bf16.gmra.mrb[0].mxu0 %v1116
    %v1910 = vpop.f32.mrb[0].mxu0
    %v1911 = vadd.f32 %v1814, %v1910
    %v1912 = vpop.f32.mrb[0].mxu0
    %v1913 = vpop.f32.mrb[0].mxu0
    %v1914 = vadd.f32 %v1817, %v1913
    %v1915 = vpop.f32.mrb[0].mxu0
    %1916 = vmatprep.mubr.bf16.mxu0 %v1126
    %1917 = vmatmul.mubr.bf16.gmra.mrb[0].mxu0 %v1125
    %v1918 = vpop.f32.mrb[0].mxu0
    %v1919 = vadd.f32 %v1822, %v1918
    %v1920 = vpop.f32.mrb[0].mxu0
    %v1921 = vpop.f32.mrb[0].mxu0
    %v1922 = vadd.f32 %v1825, %v1921
    %v1923 = vpop.f32.mrb[0].mxu0
    %1924 = vdwg.mxu0
    %1925 = vmatprep.subr.bf16.mxu0 0
    %1926 = vmatpush1.bf16.msra.mxu0 %v1538
    %1927 = vmatprep.subr.bf16.mxu0 0
    %1928 = vmatpush1.bf16.msra.mxu0 %v1539
    %1929 = vmatprep.subr.bf16.mxu0 0
    %1930 = vmatpush1.bf16.msra.mxu0 %v1540
    %1931 = vmatprep.subr.bf16.mxu0 0
    %1932 = vmatpush1.bf16.msra.mxu0 %v1541
    %1933 = vmatprep.subr.bf16.mxu0 0
    %1934 = vmatpush1.bf16.msra.mxu0 %v1542
    %1935 = vmatprep.subr.bf16.mxu0 0
    %1936 = vmatpush1.bf16.msra.mxu0 %v1543
    %1937 = vmatprep.subr.bf16.mxu0 0
    %1938 = vmatpush1.bf16.msra.mxu0 %v1544
    %1939 = vmatprep.subr.bf16.mxu0 0
    %1940 = vmatpush1.bf16.msra.mxu0 %v1545
    %1941 = vmatprep.subr.bf16.mxu0 0
    %1942 = vmatpush1.bf16.msra.mxu0 %v1546
    %1943 = vmatprep.subr.bf16.mxu0 0
    %1944 = vmatpush1.bf16.msra.mxu0 %v1547
    %1945 = vmatprep.subr.bf16.mxu0 0
    %1946 = vmatpush1.bf16.msra.mxu0 %v1548
    %1947 = vmatprep.subr.bf16.mxu0 0
    %1948 = vmatpush1.bf16.msra.mxu0 %v1549
    %1949 = vmatprep.subr.bf16.mxu0 0
    %1950 = vmatpush1.bf16.msra.mxu0 %v1550
    %1951 = vmatprep.subr.bf16.mxu0 0
    %1952 = vmatpush1.bf16.msra.mxu0 %v1551
    %1953 = vmatprep.subr.bf16.mxu0 0
    %1954 = vmatpush1.bf16.msra.mxu0 %v1552
    %1955 = vmatprep.subr.bf16.mxu0 0
    %1956 = vmatpush1.bf16.msra.mxu0 %v1553
    %1957 = vmatprep.mubr.bf16.mxu0 %v1065
    %1958 = vmatmul.mubr.bf16.gmra.mrb[0].mxu0 %v1064
    %v1959 = vpop.f32.mrb[0].mxu0
    %v1960 = vadd.f32 %v1863, %v1959
    %v1961 = vpop.f32.mrb[0].mxu0
    %v1962 = vpop.f32.mrb[0].mxu0
    %v1963 = vadd.f32 %v1866, %v1962
    %v1964 = vpop.f32.mrb[0].mxu0
    %1965 = vmatprep.mubr.bf16.mxu0 %v1074
    %1966 = vmatmul.mubr.bf16.gmra.mrb[0].mxu0 %v1073
    %v1967 = vpop.f32.mrb[0].mxu0
    %v1968 = vadd.f32 %v1871, %v1967
    %v1969 = vpop.f32.mrb[0].mxu0
    %v1970 = vpop.f32.mrb[0].mxu0
    %v1971 = vadd.f32 %v1874, %v1970
    %v1972 = vpop.f32.mrb[0].mxu0
    %1973 = vmatprep.mubr.bf16.mxu0 %v1083
    %1974 = vmatmul.mubr.bf16.gmra.mrb[0].mxu0 %v1082
    %v1975 = vpop.f32.mrb[0].mxu0
    %v1976 = vadd.f32 %v1879, %v1975
    %v1977 = vpop.f32.mrb[0].mxu0
    %v1978 = vpop.f32.mrb[0].mxu0
    %v1979 = vadd.f32 %v1882, %v1978
    %v1980 = vpop.f32.mrb[0].mxu0
    %1981 = vmatprep.mubr.bf16.mxu0 %v1092
    %1982 = vmatmul.mubr.bf16.gmra.mrb[0].mxu0 %v1091
    %v1983 = vpop.f32.mrb[0].mxu0
    %v1984 = vadd.f32 %v1887, %v1983
    %v1985 = vpop.f32.mrb[0].mxu0
    %v1986 = vpop.f32.mrb[0].mxu0
    %v1987 = vadd.f32 %v1890, %v1986
    %v1988 = vpop.f32.mrb[0].mxu0
    %1989 = vmatprep.mubr.bf16.mxu0 %v1101
    %1990 = vmatmul.mubr.bf16.gmra.mrb[0].mxu0 %v1100
    %v1991 = vpop.f32.mrb[0].mxu0
    %v1992 = vadd.f32 %v1895, %v1991
    %v1993 = vpop.f32.mrb[0].mxu0
    %v1994 = vpop.f32.mrb[0].mxu0
    %v1995 = vadd.f32 %v1898, %v1994
    %v1996 = vpop.f32.mrb[0].mxu0
    %1997 = vmatprep.mubr.bf16.mxu0 %v1110
    %1998 = vmatmul.mubr.bf16.gmra.mrb[0].mxu0 %v1109
    %v1999 = vpop.f32.mrb[0].mxu0
    %v2000 = vadd.f32 %v1903, %v1999
    %v2001 = vpop.f32.mrb[0].mxu0
    %v2002 = vpop.f32.mrb[0].mxu0
    %v2003 = vadd.f32 %v1906, %v2002
    %v2004 = vpop.f32.mrb[0].mxu0
    %2005 = vmatprep.mubr.bf16.mxu0 %v1119
    %2006 = vmatmul.mubr.bf16.gmra.mrb[0].mxu0 %v1118
    %v2007 = vpop.f32.mrb[0].mxu0
    %v2008 = vadd.f32 %v1911, %v2007
    %v2009 = vpop.f32.mrb[0].mxu0
    %v2010 = vpop.f32.mrb[0].mxu0
    %v2011 = vadd.f32 %v1914, %v2010
    %v2012 = vpop.f32.mrb[0].mxu0
    %2013 = vmatprep.mubr.bf16.mxu0 %v1128
    %2014 = vmatmul.mubr.bf16.gmra.mrb[0].mxu0 %v1127
    %v2015 = vpop.f32.mrb[0].mxu0
    %v2016 = vadd.f32 %v1919, %v2015
    %v2017 = vpop.f32.mrb[0].mxu0
    %v2018 = vpop.f32.mrb[0].mxu0
    %v2019 = vadd.f32 %v1922, %v2018
    %v2020 = vpop.f32.mrb[0].mxu0
    %2021 = vdwg.mxu0
    %2022 = vmatprep.subr.bf16.mxu0 0
    %2023 = vmatpush1.bf16.msra.mxu0 %v1554
    %2024 = vmatprep.subr.bf16.mxu0 0
    %2025 = vmatpush1.bf16.msra.mxu0 %v1555
    %2026 = vmatprep.subr.bf16.mxu0 0
    %2027 = vmatpush1.bf16.msra.mxu0 %v1556
    %2028 = vmatprep.subr.bf16.mxu0 0
    %2029 = vmatpush1.bf16.msra.mxu0 %v1557
    %2030 = vmatprep.subr.bf16.mxu0 0
    %2031 = vmatpush1.bf16.msra.mxu0 %v1558
    %2032 = vmatprep.subr.bf16.mxu0 0
    %2033 = vmatpush1.bf16.msra.mxu0 %v1559
    %2034 = vmatprep.subr.bf16.mxu0 0
    %2035 = vmatpush1.bf16.msra.mxu0 %v1560
    %2036 = vmatprep.subr.bf16.mxu0 0
    %2037 = vmatpush1.bf16.msra.mxu0 %v1561
    %2038 = vmatprep.subr.bf16.mxu0 0
    %2039 = vmatpush1.bf16.msra.mxu0 0
    %2040 = vmatprep.subr.bf16.mxu0 0
    %2041 = vmatpush1.bf16.msra.mxu0 0
    %2042 = vmatprep.subr.bf16.mxu0 0
    %2043 = vmatpush1.bf16.msra.mxu0 0
    %2044 = vmatprep.subr.bf16.mxu0 0
    %2045 = vmatpush1.bf16.msra.mxu0 0
    %2046 = vmatprep.subr.bf16.mxu0 0
    %2047 = vmatpush1.bf16.msra.mxu0 0
    %2048 = vmatprep.subr.bf16.mxu0 0
    %2049 = vmatpush1.bf16.msra.mxu0 0
    %2050 = vmatprep.subr.bf16.mxu0 0
    %2051 = vmatpush1.bf16.msra.mxu0 0
    %2052 = vmatprep.subr.bf16.mxu0 0
    %2053 = vmatpush1.bf16.msra.mxu0 0
    %2054 = vmatprep.mubr.bf16.mxu0 0
    %2055 = vmatmul.mubr.bf16.gmra.mrb[0].mxu0 %v1066
    %v2056 = vpop.f32.mrb[0].mxu0
    %v2057 = vadd.f32 %v1960, %v2056
    %v2058 = vpop.f32.mrb[0].mxu0
    %v2059 = vpop.f32.mrb[0].mxu0
    %v2060 = vadd.f32 %v1963, %v2059
    %v2061 = vpop.f32.mrb[0].mxu0
    %2062 = vmatprep.mubr.bf16.mxu0 0
    %2063 = vmatmul.mubr.bf16.gmra.mrb[0].mxu0 %v1075
    %v2064 = vpop.f32.mrb[0].mxu0
    %v2065 = vadd.f32 %v1968, %v2064
    %v2066 = vpop.f32.mrb[0].mxu0
    %v2067 = vpop.f32.mrb[0].mxu0
    %v2068 = vadd.f32 %v1971, %v2067
    %v2069 = vpop.f32.mrb[0].mxu0
    %2070 = vmatprep.mubr.bf16.mxu0 0
    %2071 = vmatmul.mubr.bf16.gmra.mrb[0].mxu0 %v1084
    %v2072 = vpop.f32.mrb[0].mxu0
    %v2073 = vadd.f32 %v1976, %v2072
    %v2074 = vpop.f32.mrb[0].mxu0
    %v2075 = vpop.f32.mrb[0].mxu0
    %v2076 = vadd.f32 %v1979, %v2075
    %v2077 = vpop.f32.mrb[0].mxu0
    %2078 = vmatprep.mubr.bf16.mxu0 0
    %2079 = vmatmul.mubr.bf16.gmra.mrb[0].mxu0 %v1093
    %v2080 = vpop.f32.mrb[0].mxu0
    %v2081 = vadd.f32 %v1984, %v2080
    %v2082 = vpop.f32.mrb[0].mxu0
    %v2083 = vpop.f32.mrb[0].mxu0
    %v2084 = vadd.f32 %v1987, %v2083
    %v2085 = vpop.f32.mrb[0].mxu0
    %2086 = vmatprep.mubr.bf16.mxu0 0
    %2087 = vmatmul.mubr.bf16.gmra.mrb[0].mxu0 %v1102
    %v2088 = vpop.f32.mrb[0].mxu0
    %v2089 = vadd.f32 %v1992, %v2088
    %v2090 = vpop.f32.mrb[0].mxu0
    %v2091 = vpop.f32.mrb[0].mxu0
    %v2092 = vadd.f32 %v1995, %v2091
    %v2093 = vpop.f32.mrb[0].mxu0
    %2094 = vmatprep.mubr.bf16.mxu0 0
    %2095 = vmatmul.mubr.bf16.gmra.mrb[0].mxu0 %v1111
    %v2096 = vpop.f32.mrb[0].mxu0
    %v2097 = vadd.f32 %v2000, %v2096
    %v2098 = vpop.f32.mrb[0].mxu0
    %v2099 = vpop.f32.mrb[0].mxu0
    %v2100 = vadd.f32 %v2003, %v2099
    %v2101 = vpop.f32.mrb[0].mxu0
    %2102 = vmatprep.mubr.bf16.mxu0 0
    %2103 = vmatmul.mubr.bf16.gmra.mrb[0].mxu0 %v1120
    %v2104 = vpop.f32.mrb[0].mxu0
    %v2105 = vadd.f32 %v2008, %v2104
    %v2106 = vpop.f32.mrb[0].mxu0
    %v2107 = vpop.f32.mrb[0].mxu0
    %v2108 = vadd.f32 %v2011, %v2107
    %v2109 = vpop.f32.mrb[0].mxu0
    %2110 = vmatprep.mubr.bf16.mxu0 0
    %2111 = vmatmul.mubr.bf16.gmra.mrb[0].mxu0 %v1129
    %v2112 = vpop.f32.mrb[0].mxu0
    %v2113 = vadd.f32 %v2016, %v2112
    %v2114 = vpop.f32.mrb[0].mxu0
    %v2115 = vpop.f32.mrb[0].mxu0
    %v2116 = vadd.f32 %v2019, %v2115
    %v2117 = vpop.f32.mrb[0].mxu0
    %2118 = vdwg.mxu0
    %v2119 = vld [vmem:[%s2] sm:$0x1]
    %v2120 = vld [vmem:[%s5] sm:$0x1]
    %v2121 = vld [vmem:[%s6] sm:$0x1]
    %v2122 = vld [vmem:[%s4] sm:$0x1]
    %v2124 = vlaneseq
    %v2125 = vshrl.u32 %v2124, 7
    %v2126 = vsub.s32 0, %v2125
    %v2127 = vrot.slane %v2119, %v2126
    %v2129 = vmul.f32 %v2057, %v2127
    %v2130 = vmul.f32 %v2060, %v2127
    %v2131 = vmul.f32 %v2065, %v2127
    %v2132 = vmul.f32 %v2068, %v2127
    %v2133 = vmul.f32 %v2073, %v2127
    %v2134 = vmul.f32 %v2076, %v2127
    %v2135 = vmul.f32 %v2081, %v2127
    %v2136 = vmul.f32 %v2084, %v2127
    %v2137 = vmul.f32 %v2089, %v2127
    %v2138 = vmul.f32 %v2092, %v2127
    %v2139 = vmul.f32 %v2097, %v2127
    %v2140 = vmul.f32 %v2100, %v2127
    %v2141 = vmul.f32 %v2105, %v2127
    %v2142 = vmul.f32 %v2108, %v2127
    %v2143 = vmul.f32 %v2113, %v2127
    %v2144 = vmul.f32 %v2116, %v2127
    %v2146 = vlaneseq
    %v2147 = vshrl.u32 %v2146, 7
    %v2148 = vsub.s32 0, %v2147
    %v2149 = vrot.slane %v2120, %v2148
    %v2151 = vadd.f32 %v2129, %v2149
    %v2152 = vadd.f32 %v2130, %v2149
    %v2153 = vadd.f32 %v2131, %v2149
    %v2154 = vadd.f32 %v2132, %v2149
    %v2155 = vadd.f32 %v2133, %v2149
    %v2156 = vadd.f32 %v2134, %v2149
    %v2157 = vadd.f32 %v2135, %v2149
    %v2158 = vadd.f32 %v2136, %v2149
    %v2159 = vadd.f32 %v2137, %v2149
    %v2160 = vadd.f32 %v2138, %v2149
    %v2161 = vadd.f32 %v2139, %v2149
    %v2162 = vadd.f32 %v2140, %v2149
    %v2163 = vadd.f32 %v2141, %v2149
    %v2164 = vadd.f32 %v2142, %v2149
    %v2165 = vadd.f32 %v2143, %v2149
    %v2166 = vadd.f32 %v2144, %v2149
    %vm2167 = vcmp.gt.f32.partialorder %v2151, 0.0
    %vm2168 = vcmp.gt.f32.partialorder %v2152, 0.0
    %vm2169 = vcmp.gt.f32.partialorder %v2153, 0.0
    %vm2170 = vcmp.gt.f32.partialorder %v2154, 0.0
    %vm2171 = vcmp.gt.f32.partialorder %v2155, 0.0
    %vm2172 = vcmp.gt.f32.partialorder %v2156, 0.0
    %vm2173 = vcmp.gt.f32.partialorder %v2157, 0.0
    %vm2174 = vcmp.gt.f32.partialorder %v2158, 0.0
    %vm2175 = vcmp.gt.f32.partialorder %v2159, 0.0
    %vm2176 = vcmp.gt.f32.partialorder %v2160, 0.0
    %vm2177 = vcmp.gt.f32.partialorder %v2161, 0.0
    %vm2178 = vcmp.gt.f32.partialorder %v2162, 0.0
    %vm2179 = vcmp.gt.f32.partialorder %v2163, 0.0
    %vm2180 = vcmp.gt.f32.partialorder %v2164, 0.0
    %vm2181 = vcmp.gt.f32.partialorder %v2165, 0.0
    %vm2182 = vcmp.gt.f32.partialorder %v2166, 0.0
    %v2184 = vlaneseq
    %v2185 = vshrl.u32 %v2184, 7
    %v2186 = vsub.s32 0, %v2185
    %v2187 = vrot.slane %v2122, %v2186
    %v2189 = vmul.f32 %v2187, %v2151
    %v2190 = vmul.f32 %v2187, %v2152
    %v2191 = vmul.f32 %v2187, %v2153
    %v2192 = vmul.f32 %v2187, %v2154
    %v2193 = vmul.f32 %v2187, %v2155
    %v2194 = vmul.f32 %v2187, %v2156
    %v2195 = vmul.f32 %v2187, %v2157
    %v2196 = vmul.f32 %v2187, %v2158
    %v2197 = vmul.f32 %v2187, %v2159
    %v2198 = vmul.f32 %v2187, %v2160
    %v2199 = vmul.f32 %v2187, %v2161
    %v2200 = vmul.f32 %v2187, %v2162
    %v2201 = vmul.f32 %v2187, %v2163
    %v2202 = vmul.f32 %v2187, %v2164
    %v2203 = vmul.f32 %v2187, %v2165
    %v2204 = vmul.f32 %v2187, %v2166
    %v2205 = vsel %vm2167, %v2151, %v2189
    %v2206 = vsel %vm2168, %v2152, %v2190
    %v2207 = vsel %vm2169, %v2153, %v2191
    %v2208 = vsel %vm2170, %v2154, %v2192
    %v2209 = vsel %vm2171, %v2155, %v2193
    %v2210 = vsel %vm2172, %v2156, %v2194
    %v2211 = vsel %vm2173, %v2157, %v2195
    %v2212 = vsel %vm2174, %v2158, %v2196
    %v2213 = vsel %vm2175, %v2159, %v2197
    %v2214 = vsel %vm2176, %v2160, %v2198
    %v2215 = vsel %vm2177, %v2161, %v2199
    %v2216 = vsel %vm2178, %v2162, %v2200
    %v2217 = vsel %vm2179, %v2163, %v2201
    %v2218 = vsel %vm2180, %v2164, %v2202
    %v2219 = vsel %vm2181, %v2165, %v2203
    %v2220 = vsel %vm2182, %v2166, %v2204
    %v2222 = vlaneseq
    %v2223 = vshrl.u32 %v2222, 7
    %v2224 = vsub.s32 0, %v2223
    %v2225 = vrot.slane %v2121, %v2224
    %v2227 = vadd.f32 %v2205, %v2225
    %v2228 = vadd.f32 %v2206, %v2225
    %v2229 = vadd.f32 %v2207, %v2225
    %v2230 = vadd.f32 %v2208, %v2225
    %v2231 = vadd.f32 %v2209, %v2225
    %v2232 = vadd.f32 %v2210, %v2225
    %v2233 = vadd.f32 %v2211, %v2225
    %v2234 = vadd.f32 %v2212, %v2225
    %v2235 = vadd.f32 %v2213, %v2225
    %v2236 = vadd.f32 %v2214, %v2225
    %v2237 = vadd.f32 %v2215, %v2225
    %v2238 = vadd.f32 %v2216, %v2225
    %v2239 = vadd.f32 %v2217, %v2225
    %v2240 = vadd.f32 %v2218, %v2225
    %v2241 = vadd.f32 %v2219, %v2225
    %v2242 = vadd.f32 %v2220, %v2225
    %2243 = vst [vmem:[#allocation8] sm:$0xff] %v2227
    %2244 = vst [vmem:[#allocation8 + $0x8] sm:$0xff] %v2228
    %2245 = vst [vmem:[#allocation8 + $0x10] sm:$0xff] %v2229
    %2246 = vst [vmem:[#allocation8 + $0x18] sm:$0xff] %v2230
    %2247 = vst [vmem:[#allocation8 + $0x20] sm:$0xff] %v2231
    %2248 = vst [vmem:[#allocation8 + $0x28] sm:$0xff] %v2232
    %2249 = vst [vmem:[#allocation8 + $0x30] sm:$0xff] %v2233
    %2250 = vst [vmem:[#allocation8 + $0x38] sm:$0xff] %v2234
    %2251 = vst [vmem:[#allocation8 + $0x40] sm:$0xff] %v2235
    %2252 = vst [vmem:[#allocation8 + $0x48] sm:$0xff] %v2236
    %2253 = vst [vmem:[#allocation8 + $0x50] sm:$0xff] %v2237
    %2254 = vst [vmem:[#allocation8 + $0x58] sm:$0xff] %v2238
    %2255 = vst [vmem:[#allocation8 + $0x60] sm:$0xff] %v2239
    %2256 = vst [vmem:[#allocation8 + $0x68] sm:$0xff] %v2240
    %2257 = vst [vmem:[#allocation8 + $0x70] sm:$0xff] %v2241
    %2258 = vst [vmem:[#allocation8 + $0x78] sm:$0xff] %v2242
    // Predicated region
    $region38: #{tpu_custom_call.1} parent=1 // pred_check
      _
    $region39: #{tpu_custom_call.1} parent=1 // pred_check_branch
      %2260 = sbr.rel (0) target = $region41
    $region40: #{tpu_custom_call.1} parent=1 // pred_region
      %s2262 = ssub.s32 2048, 2048
      %2263 = vsyncadd [#allocation5], %s2262
      %s2264 = sshll.u32 [#allocation8], 4
      %s2265 = int_to_ptr.vmem [resolvable:$true] %s2264
      %2270 = dma.vmem_to_hbm [thread:$0]  %s2265, 2048, %s7, [#allocation5], 128, 128, 8
    $region41: #{tpu_custom_call.1} parent=1 // pred_fallthru
      _
    // Predicated region
    $region42: #{tpu_custom_call.1} parent=1 // pred_check
      _
    $region43: #{tpu_custom_call.1} parent=1 // pred_check_branch
      %2272 = sbr.rel (0) target = $region45
    $region44: #{tpu_custom_call.1} parent=1 // pred_region
      %2273 = dma.done [#allocation5], 2048
    $region45: #{tpu_custom_call.1} parent=1 // pred_fallthru
      _
    %2274 = vsyncpa [#allocation4], 1
    %2275 = vsyncpa [#allocation7], 1
    %2276 = vsyncpa [#allocation5], 1

</llo_original>
